<compile_context>
chip_gen: v7x
topology: tpu7x:2x2x1
jax: 0.10.0
libtpu: 0.0.40
codegen_flags: <defaults>
</compile_context>

<pallas_src>
import functools

import jax
import jax.numpy as jnp
from jax import lax
from jax.experimental import pallas as pl
from jax.experimental.pallas import tpu as pltpu


def _sigmoid(z, fast):
    e = jnp.exp(-z)                                   # EUP
    if fast:
        return pl.reciprocal(1.0 + e, approx=True)    # EUP, frees VALU slots
    return 1.0 / (1.0 + e)


# --------------------------------------------------------------------------
# Fused MBConv kernel.  One grid step processes NB images in the "wide"
# lane-dense (rows, W*C) layout; all matmuls run with M = NB*H rows.
# --------------------------------------------------------------------------
def _mbconv_kernel(x_ref, wexp_ref, wdw_ref, wse1_ref, wse2_ref, wproj_ref,
                   bwide_ref, bn2b_ref, bse1_ref, o_ref, *,
                   K, NB, H, W, C, apply_residual, fast, mm_dtype):
    WC = W * C
    pad = (K - 1) // 2
    M = NB * H

    x = x_ref[...].reshape(M, -1)                     # (NB*H, W*Cin) f32

    # ---- expand 1x1 (block-diag over W, bn0 scale folded) + bias + swish ----
    z = jnp.dot(x.astype(mm_dtype), wexp_ref[...],
                preferred_element_type=jnp.float32)   # (M, W*Cexp)
    z = z + bwide_ref[0:1, :]
    h = z * _sigmoid(z, fast)

    # ---- depthwise KxK, stride 1, SAME (bn1 scale folded into the taps) ----
    # w-offsets: lane rolls (SAME w-boundary mask folded into the tap rows);
    # h-offsets: sublane rolls + iota row mask; kh==pad is a plain accumulate.
    rolled_w = [h if kw == pad else
                pltpu.roll(h, shift=((pad - kw) * C) % WC, axis=1)
                for kw in range(K)]
    row = lax.broadcasted_iota(jnp.int32, (M, 1), 0)
    if H & (H - 1) == 0:
        rin = jnp.bitwise_and(row, H - 1)             # row index within image
    else:
        rin = row - (row // H) * H
    acc = jnp.zeros((M, WC), jnp.float32)
    for kh in range(K):
        inner = rolled_w[0] * wdw_ref[kh * K:kh * K + 1, :]
        for kw in range(1, K):
            inner = inner + rolled_w[kw] * wdw_ref[kh * K + kw:kh * K + kw + 1, :]
        dh = kh - pad
        if dh == 0:
            acc = acc + inner                         # identity shift: free
        else:
            shifted = pltpu.roll(inner, shift=(-dh) % M, axis=0)
            ok = jnp.logical_and(rin + dh >= 0, rin + dh < H)
            acc = acc + jnp.where(ok, shifted, 0.0)
    z = acc + bwide_ref[1:2, :]
    hdw = z * _sigmoid(z, fast)                       # (M, W*Cexp)

    # ---- squeeze-and-excite (gate computed and applied in-register) ----
    # SE-reduce fused with the pooling W-fold (1/(H*W) folded into wse1);
    # a per-image row-sum finishes the global average pool.
    s_rows = jnp.dot(hdw.astype(mm_dtype), wse1_ref[...],
                     preferred_element_type=jnp.float32)          # (M, CsqP)
    per_img = [jnp.sum(s_rows[i * H:(i + 1) * H, :], axis=0, keepdims=True)
               for i in range(NB)]
    s = per_img[0] if NB == 1 else jnp.concatenate(per_img, axis=0)  # (NB, CsqP)
    s = s + bse1_ref[...]
    s = s * _sigmoid(s, fast)
    # SE-expand fused with the gate broadcast back to the wide layout.
    g = jnp.dot(s.astype(mm_dtype), wse2_ref[...],
                preferred_element_type=jnp.float32) + bwide_ref[2:3, :]
    gate = _sigmoid(g, fast)                                         # (NB, W*Cexp)

    if NB == 1:
        hg = hdw * gate
    else:
        hg = jnp.concatenate(
            [hdw[i * H:(i + 1) * H, :] * gate[i:i + 1, :] for i in range(NB)],
            axis=0)

    # ---- project 1x1 (block-diag, bn2 scale folded) + bias (+ identity skip) ----
    out = jnp.dot(hg.astype(mm_dtype), wproj_ref[...],
                  preferred_element_type=jnp.float32)                # (M, W*Cout)
    out = out + bn2b_ref[...]
    if apply_residual:
        out = out + x
    o_ref[...] = out.reshape(NB, H, -1).astype(o_ref.dtype)


# --------------------------------------------------------------------------
# Wrapper: builds the lane-dense ("wide") folded operands and calls the kernel
# --------------------------------------------------------------------------
def mbconv_forward(x_nchw, p, *, id_skip=True, stride=1,
                   matmul_dtype=jnp.bfloat16, images_per_step=1):
    # TODO(synk): stride != 1 depthwise conv, drop_connect (stochastic depth)
    # and the expand_ratio == 1 (no expand conv) variant are not implemented;
    # the block is exercised as in the default module call (stride=1,
    # drop_connect_rate=None, expand_ratio > 1).
    if stride != 1:
        raise NotImplementedError("stride != 1 not supported by this kernel")
    # TODO(synk): at real EfficientNet sizes the W^2-scaling block-diagonal 1x1
    # weights need a W-tiled build (or a dense (H*W, C) matmul once Cexp>=128)
    # plus single-buffered weight specs (pipeline_mode=pl.Buffered(1)) to stay
    # inside v7x's 64 MiB VMEM.
    # TODO(synk): accept NHWC / bf16 activations at the boundary to drop the
    # two XLA transposes and halve activation HBM traffic at large H*W.

    N, Cin, H, W = x_nchw.shape
    Cexp = p["w_exp"].shape[1]
    Cout = p["w_proj"].shape[1]
    Csq = p["w_se1"].shape[1]
    K = p["w_dw"].shape[0]
    pad = (K - 1) // 2
    NB = int(images_per_step)
    assert N % NB == 0, "batch must be divisible by images_per_step"
    CsqP = 128 * pl.cdiv(Csq, 128)            # lane-dense padded squeeze width
    f32 = jnp.float32
    fast = (matmul_dtype != jnp.float32)
    inv_hw = 1.0 / float(H * W)

    def block_diag(w):        # (Ci, Co) -> (W*Ci, W*Co): W copies on the diagonal
        eye = jnp.eye(W, dtype=w.dtype)
        Ci, Co = w.shape
        return jnp.einsum("xy,io->xiyo", eye, w).reshape(W * Ci, W * Co)

    def tile_c(v):            # (C,) / (1,C) -> (1, W*C), channel-minor wide layout
        return jnp.tile(jnp.asarray(v, f32).reshape(1, -1), (1, W))

    # -- 1x1 convs: BN scales folded into the weights (f32 fold, cast once) --
    wexp_big = block_diag(p["w_exp"] * p["bn0_scale"].reshape(1, -1)).astype(matmul_dtype)
    wproj_big = block_diag(p["w_proj"] * p["bn2_scale"].reshape(1, -1)).astype(matmul_dtype)

    # -- depthwise taps: W-tiled, SAME w-mask and bn1 scale folded in (f32 VPU operand) --
    w_idx = jnp.arange(W)
    bn1s_wide = tile_c(p["bn1_scale"]).reshape(-1)
    rows = []
    for kh in range(K):
        for kw in range(K):
            dw = kw - pad
            valid = ((w_idx + dw >= 0) & (w_idx + dw < W)).astype(f32)        # (W,)
            rows.append(jnp.repeat(valid, Cexp) * jnp.tile(p["w_dw"][kh, kw, :], W)
                        * bn1s_wide)
    wdw_eff = jnp.stack(rows, axis=0)                                         # (K*K, W*Cexp)

    # -- SE: reduce fused with the pooling W-fold, expand fused with the gate broadcast --
    wse1_t = jnp.zeros((W * Cexp, CsqP), f32)
    wse1_t = wse1_t.at[:, :Csq].set(jnp.tile(p["w_se1"] * inv_hw, (W, 1)))
    wse2_t = jnp.zeros((CsqP, W * Cexp), f32)
    wse2_t = wse2_t.at[:Csq, :].set(jnp.tile(p["w_se2"], (1, W)))
    wse1_t = wse1_t.astype(matmul_dtype)
    wse2_t = wse2_t.astype(matmul_dtype)
    bse1 = jnp.zeros((1, CsqP), f32).at[:, :Csq].set(
        jnp.asarray(p["b_se1"], f32).reshape(1, -1))

    # -- remaining per-channel biases, packed into one wide operand --
    bwide = jnp.concatenate([tile_c(p["bn0_bias"]),
                             tile_c(p["bn1_bias"]),
                             tile_c(p["b_se2"])], axis=0)                     # (3, W*Cexp)
    bn2b_w = tile_c(p["bn2_bias"])                                            # (1, W*Cout)

    # lane-dense wide NHWC input
    x_w = jnp.transpose(x_nchw, (0, 2, 3, 1)).astype(f32).reshape(N, H, W * Cin)

    apply_residual = bool(id_skip and stride == 1 and Cin == Cout)

    kernel = functools.partial(_mbconv_kernel, K=K, NB=NB, H=H, W=W, C=Cexp,
                               apply_residual=apply_residual, fast=fast,
                               mm_dtype=matmul_dtype)

    def full(shape):
        nd = len(shape)
        return pl.BlockSpec(shape, lambda n, nd=nd: (0,) * nd)

    out_w = pl.pallas_call(
        kernel,
        out_shape=jax.ShapeDtypeStruct((N, H, W * Cout), f32),
        grid_spec=pltpu.PrefetchScalarGridSpec(
            num_scalar_prefetch=0,
            grid=(N // NB,),
            in_specs=[
                pl.BlockSpec((NB, H, W * Cin), lambda n: (n, 0, 0)),   # x
                full((W * Cin, W * Cexp)),        # expand weight (bn0 scale folded)
                full((K * K, W * Cexp)),          # depthwise taps (w-mask + bn1 scale folded)
                full((W * Cexp, CsqP)),           # SE reduce (pool fold + 1/(H*W) folded)
                full((CsqP, W * Cexp)),           # SE expand (gate broadcast folded)
                full((W * Cexp, W * Cout)),       # project weight (bn2 scale folded)
                full((3, W * Cexp)),              # biases: bn0 / bn1 / se2
                full((1, W * Cout)),              # bn2 bias
                full((1, CsqP)),                  # se1 bias
            ],
            out_specs=pl.BlockSpec((NB, H, W * Cout), lambda n: (n, 0, 0)),
        ),
        compiler_params=pltpu.CompilerParams(
            dimension_semantics=("parallel",),
            vmem_limit_bytes=32 * 1024 * 1024),
    )(x_w, wexp_big, wdw_eff, wse1_t, wse2_t, wproj_big, bwide, bn2b_w, bse1)

    out = out_w.reshape(N, H, W, Cout)
    return jnp.transpose(out, (0, 3, 1, 2))   # back to NCHW


# --------------------------------------------------------------------------
# Pure-JAX reference (inference-mode BN) used only for correctness checking
# --------------------------------------------------------------------------
def mbconv_reference(x_nchw, p, *, id_skip=True, stride=1):
    N, Cin, H, W = x_nchw.shape
    x = jnp.transpose(x_nchw, (0, 2, 3, 1)).astype(jnp.float32)

    def swish(z):
        return z * (1.0 / (1.0 + jnp.exp(-z)))

    h = jnp.einsum("nhwc,co->nhwo", x, p["w_exp"])
    h = h * p["bn0_scale"].reshape(1, 1, 1, -1) + p["bn0_bias"].reshape(1, 1, 1, -1)
    h = swish(h)

    Cexp = h.shape[-1]
    K = p["w_dw"].shape[0]
    dw = p["w_dw"].reshape(K, K, 1, Cexp)
    h = lax.conv_general_dilated(h, dw, window_strides=(1, 1), padding="SAME",
                                 dimension_numbers=("NHWC", "HWIO", "NHWC"),
                                 feature_group_count=Cexp)
    h = h * p["bn1_scale"].reshape(1, 1, 1, -1) + p["bn1_bias"].reshape(1, 1, 1, -1)
    h = swish(h)

    pooled = jnp.mean(h, axis=(1, 2))                           # (N, Cexp)
    s = swish(pooled @ p["w_se1"] + p["b_se1"].reshape(1, -1))
    s = s @ p["w_se2"] + p["b_se2"].reshape(1, -1)
    gate = 1.0 / (1.0 + jnp.exp(-s))
    h = h * gate[:, None, None, :]

    out = jnp.einsum("nhwc,co->nhwo", h, p["w_proj"])
    out = out * p["bn2_scale"].reshape(1, 1, 1, -1) + p["bn2_bias"].reshape(1, 1, 1, -1)
    Cout = out.shape[-1]
    if id_skip and stride == 1 and Cin == Cout:
        out = out + x
    return jnp.transpose(out, (0, 3, 1, 2))


# --------------------------------------------------------------------------
# Deterministic synthetic parameters (matching the module's layer shapes)
# --------------------------------------------------------------------------
def make_params(key, cin, expand_ratio, k, se_ratio, cout, eps=1e-3):
    cexp = cin * expand_ratio
    csq = max(1, int(cin * se_ratio))
    keys = jax.random.split(key, 10)

    def bn_fold(kk, c):
        k1, k2, k3, k4 = jax.random.split(kk, 4)
        gamma = 1.0 + 0.1 * jax.random.normal(k1, (c,), jnp.float32)
        beta = 0.1 * jax.random.normal(k2, (c,), jnp.float32)
        mean = 0.1 * jax.random.normal(k3, (c,), jnp.float32)
        var = 1.0 + 0.1 * jnp.abs(jax.random.normal(k4, (c,), jnp.float32))
        scale = gamma / jnp.sqrt(var + eps)
        bias = beta - mean * scale
        return scale.reshape(1, c), bias.reshape(1, c)

    w_exp = 0.1 * jax.random.normal(keys[0], (cin, cexp), jnp.float32)
    bn0_scale, bn0_bias = bn_fold(keys[1], cexp)
    w_dw = 0.1 * jax.random.normal(keys[2], (k, k, cexp), jnp.float32)
    bn1_scale, bn1_bias = bn_fold(keys[3], cexp)

    w_se1 = 0.1 * jax.random.normal(keys[4], (cexp, csq), jnp.float32)
    b_se1 = 0.1 * jax.random.normal(keys[5], (csq,), jnp.float32)
    w_se2 = 0.1 * jax.random.normal(keys[6], (csq, cexp), jnp.float32)
    b_se2 = 0.1 * jax.random.normal(keys[7], (cexp,), jnp.float32)

    w_proj = 0.1 * jax.random.normal(keys[8], (cexp, cout), jnp.float32)
    bn2_scale, bn2_bias = bn_fold(keys[9], cout)

    return dict(w_exp=w_exp, bn0_scale=bn0_scale, bn0_bias=bn0_bias,
                w_dw=w_dw, bn1_scale=bn1_scale, bn1_bias=bn1_bias,
                w_se1=w_se1, b_se1=b_se1, w_se2=w_se2, b_se2=b_se2,
                w_proj=w_proj, bn2_scale=bn2_scale, bn2_bias=bn2_bias)


if __name__ == "__main__":
    # Block args: input_filters=8, expand_ratio=4, kernel_size=3, stride=1,
    #             se_ratio=0.25, output_filters=8, id_skip=True
    N, CIN, H, W = 2, 8, 16, 16
    EXPAND, KSIZE, STRIDE, SE_RATIO, COUT = 4, 3, 1, 0.25, 8

    key = jax.random.PRNGKey(0)
    kx, kp = jax.random.split(key)
    x = jax.random.normal(kx, (N, CIN, H, W), jnp.float32)
    params = make_params(kp, CIN, EXPAND, KSIZE, SE_RATIO, COUT)

    ref = mbconv_reference(x, params, id_skip=True, stride=STRIDE)

    # exact-math path (f32 MXU operands, exact sigmoid): tight correctness check
    out_f32 = mbconv_forward(x, params, id_skip=True, stride=STRIDE,
                             matmul_dtype=jnp.float32)
    out_f32 = jax.block_until_ready(out_f32)
    assert out_f32.shape == (N, COUT, H, W)
    assert jnp.allclose(out_f32, ref, atol=2e-3, rtol=2e-3)

    # fast path (bf16 MXU operands + EUP approx reciprocal): performance default
    out = mbconv_forward(x, params, id_skip=True, stride=STRIDE,
                         matmul_dtype=jnp.bfloat16)
    out = jax.block_until_ready(out)
    assert out.shape == (N, COUT, H, W)
    assert jnp.allclose(out, ref, atol=3e-2, rtol=3e-2)

    # M-batched path (2 images per grid step -> M=32 matmuls): same semantics
    out_b = mbconv_forward(x, params, id_skip=True, stride=STRIDE,
                           matmul_dtype=jnp.bfloat16, images_per_step=2)
    out_b = jax.block_until_ready(out_b)
    assert out_b.shape == (N, COUT, H, W)
    assert jnp.allclose(out_b, ref, atol=3e-2, rtol=3e-2)

    print("KERNEL_OK")
</pallas_src>

<mosaic_0001>
module attributes {stable_mosaic.version = 11 : i64} {
  func.func @_mbconv_kernel(%arg0: i32, %arg1: memref<1x16x128xf32, #tpu.memory_space<vmem>>, %arg2: memref<128x512xf32, #tpu.memory_space<vmem>>, %arg3: memref<9x512xf32, #tpu.memory_space<vmem>>, %arg4: memref<512x128xf32, #tpu.memory_space<vmem>>, %arg5: memref<128x512xf32, #tpu.memory_space<vmem>>, %arg6: memref<512x128xf32, #tpu.memory_space<vmem>>, %arg7: memref<3x512xf32, #tpu.memory_space<vmem>>, %arg8: memref<1x128xf32, #tpu.memory_space<vmem>>, %arg9: memref<1x128xf32, #tpu.memory_space<vmem>>, %arg10: memref<1x16x128xf32, #tpu.memory_space<vmem>>) attributes {dimension_semantics = [#tpu.dimension_semantics<parallel>], iteration_bounds = array<i64: 2>, scalar_prefetch = 0 : i64, scratch_operands = 0 : i64, tpu.core_type = #tpu.core_type<tc>, window_params = [{transform_indices = @transform_0, window_bounds = array<i64: 1, 16, 128>}, {pipeline_mode = #tpu.pipeline_mode<synchronous>, transform_indices = @transform_1, window_bounds = array<i64: 128, 512>}, {pipeline_mode = #tpu.pipeline_mode<synchronous>, transform_indices = @transform_2, window_bounds = array<i64: 9, 512>}, {pipeline_mode = #tpu.pipeline_mode<synchronous>, transform_indices = @transform_3, window_bounds = array<i64: 512, 128>}, {pipeline_mode = #tpu.pipeline_mode<synchronous>, transform_indices = @transform_4, window_bounds = array<i64: 128, 512>}, {pipeline_mode = #tpu.pipeline_mode<synchronous>, transform_indices = @transform_5, window_bounds = array<i64: 512, 128>}, {pipeline_mode = #tpu.pipeline_mode<synchronous>, transform_indices = @transform_6, window_bounds = array<i64: 3, 512>}, {pipeline_mode = #tpu.pipeline_mode<synchronous>, transform_indices = @transform_7, window_bounds = array<i64: 1, 128>}, {pipeline_mode = #tpu.pipeline_mode<synchronous>, transform_indices = @transform_8, window_bounds = array<i64: 1, 128>}, {transform_indices = @transform_9, window_bounds = array<i64: 1, 16, 128>}]} {
    %c0 = arith.constant 0 : index
    %c0_0 = arith.constant 0 : index
    %c0_1 = arith.constant 0 : index
    %0 = vector.load %arg1[%c0, %c0_0, %c0_1] : memref<1x16x128xf32, #tpu.memory_space<vmem>>, vector<1x16x128xf32>
    %1 = vector.shape_cast %0 : vector<1x16x128xf32> to vector<16x128xf32>
    %c0_2 = arith.constant 0 : index
    %c0_3 = arith.constant 0 : index
    %2 = vector.load %arg2[%c0_2, %c0_3] : memref<128x512xf32, #tpu.memory_space<vmem>>, vector<128x512xf32>
    %cst = arith.constant dense<0.000000e+00> : vector<16x512xf32>
    %3 = tpu.matmul %1, %2, %cst {dimension_numbers = #tpu.dot_dimension_numbers<[1], [0], [0], [1], [0, 0, 1, 1], [], []>} : vector<16x128xf32>, vector<128x512xf32>, vector<16x512xf32> -> vector<16x512xf32>
    %c0_4 = arith.constant 0 : index
    %c0_5 = arith.constant 0 : index
    %4 = vector.load %arg7[%c0_4, %c0_5] : memref<3x512xf32, #tpu.memory_space<vmem>>, vector<1x512xf32>
    %5 = vector.broadcast %4 : vector<1x512xf32> to vector<16x512xf32>
    %6 = arith.addf %3, %5 : vector<16x512xf32>
    %cst_6 = arith.constant 0.000000e+00 : f32
    %7 = vector.broadcast %cst_6 : f32 to vector<16x512xf32>
    %8 = arith.subf %7, %6 : vector<16x512xf32>
    %9 = math.exp %8 : vector<16x512xf32>
    %cst_7 = arith.constant 1.000000e+00 : f32
    %10 = vector.broadcast %cst_7 : f32 to vector<16x512xf32>
    %11 = arith.addf %10, %9 : vector<16x512xf32>
    %cst_8 = arith.constant 1.000000e+00 : f32
    %12 = vector.broadcast %cst_8 : f32 to vector<16x512xf32>
    %13 = arith.divf %12, %11 : vector<16x512xf32>
    %14 = arith.mulf %6, %13 : vector<16x512xf32>
    %c32_i32 = arith.constant 32 : i32
    %15 = tpu.dynamic_rotate %14 by %c32_i32 dim 1 : vector<16x512xf32>, i32 -> vector<16x512xf32>
    %c480_i32 = arith.constant 480 : i32
    %16 = tpu.dynamic_rotate %14 by %c480_i32 dim 1 : vector<16x512xf32>, i32 -> vector<16x512xf32>
    %17 = tpu.iota {dimensions = array<i32: 0>} : vector<16x1xi32>
    %c15_i32 = arith.constant 15 : i32
    %18 = vector.broadcast %c15_i32 : i32 to vector<16x1xi32>
    %19 = arith.andi %17, %18 : vector<16x1xi32>
    %cst_9 = arith.constant 0.000000e+00 : f32
    %20 = vector.broadcast %cst_9 : f32 to vector<16x512xf32>
    %c0_10 = arith.constant 0 : index
    %c0_11 = arith.constant 0 : index
    %21 = vector.load %arg3[%c0_10, %c0_11] : memref<9x512xf32, #tpu.memory_space<vmem>>, vector<1x512xf32>
    %22 = vector.broadcast %21 : vector<1x512xf32> to vector<16x512xf32>
    %23 = arith.mulf %15, %22 : vector<16x512xf32>
    %c1 = arith.constant 1 : index
    %c0_12 = arith.constant 0 : index
    %24 = vector.load %arg3[%c1, %c0_12] : memref<9x512xf32, #tpu.memory_space<vmem>>, vector<1x512xf32>
    %25 = vector.broadcast %24 : vector<1x512xf32> to vector<16x512xf32>
    %26 = arith.mulf %14, %25 : vector<16x512xf32>
    %27 = arith.addf %23, %26 : vector<16x512xf32>
    %c2 = arith.constant 2 : index
    %c0_13 = arith.constant 0 : index
    %28 = vector.load %arg3[%c2, %c0_13] : memref<9x512xf32, #tpu.memory_space<vmem>>, vector<1x512xf32>
    %29 = vector.broadcast %28 : vector<1x512xf32> to vector<16x512xf32>
    %30 = arith.mulf %16, %29 : vector<16x512xf32>
    %31 = arith.addf %27, %30 : vector<16x512xf32>
    %c1_i32 = arith.constant 1 : i32
    %32 = tpu.dynamic_rotate %31 by %c1_i32 dim 0 : vector<16x512xf32>, i32 -> vector<16x512xf32>
    %c-1_i32 = arith.constant -1 : i32
    %33 = vector.broadcast %c-1_i32 : i32 to vector<16x1xi32>
    %34 = arith.addi %19, %33 : vector<16x1xi32>
    %c0_i32 = arith.constant 0 : i32
    %35 = vector.broadcast %c0_i32 : i32 to vector<16x1xi32>
    %36 = arith.cmpi sge, %34, %35 : vector<16x1xi32>
    %c-1_i32_14 = arith.constant -1 : i32
    %37 = vector.broadcast %c-1_i32_14 : i32 to vector<16x1xi32>
    %38 = arith.addi %19, %37 : vector<16x1xi32>
    %c16_i32 = arith.constant 16 : i32
    %39 = vector.broadcast %c16_i32 : i32 to vector<16x1xi32>
    %40 = arith.cmpi slt, %38, %39 : vector<16x1xi32>
    %41 = arith.andi %36, %40 : vector<16x1xi1>
    %cst_15 = arith.constant 0.000000e+00 : f32
    %42 = vector.shape_cast %41 : vector<16x1xi1> to vector<16x1xi1>
    %43 = vector.broadcast %42 : vector<16x1xi1> to vector<16x512xi1>
    %44 = vector.broadcast %cst_15 : f32 to vector<16x512xf32>
    %45 = arith.select %43, %32, %44 : vector<16x512xi1>, vector<16x512xf32>
    %46 = arith.addf %20, %45 : vector<16x512xf32>
    %c3 = arith.constant 3 : index
    %c0_16 = arith.constant 0 : index
    %47 = vector.load %arg3[%c3, %c0_16] : memref<9x512xf32, #tpu.memory_space<vmem>>, vector<1x512xf32>
    %48 = vector.broadcast %47 : vector<1x512xf32> to vector<16x512xf32>
    %49 = arith.mulf %15, %48 : vector<16x512xf32>
    %c4 = arith.constant 4 : index
    %c0_17 = arith.constant 0 : index
    %50 = vector.load %arg3[%c4, %c0_17] : memref<9x512xf32, #tpu.memory_space<vmem>>, vector<1x512xf32>
    %51 = vector.broadcast %50 : vector<1x512xf32> to vector<16x512xf32>
    %52 = arith.mulf %14, %51 : vector<16x512xf32>
    %53 = arith.addf %49, %52 : vector<16x512xf32>
    %c5 = arith.constant 5 : index
    %c0_18 = arith.constant 0 : index
    %54 = vector.load %arg3[%c5, %c0_18] : memref<9x512xf32, #tpu.memory_space<vmem>>, vector<1x512xf32>
    %55 = vector.broadcast %54 : vector<1x512xf32> to vector<16x512xf32>
    %56 = arith.mulf %16, %55 : vector<16x512xf32>
    %57 = arith.addf %53, %56 : vector<16x512xf32>
    %58 = arith.addf %46, %57 : vector<16x512xf32>
    %c6 = arith.constant 6 : index
    %c0_19 = arith.constant 0 : index
    %59 = vector.load %arg3[%c6, %c0_19] : memref<9x512xf32, #tpu.memory_space<vmem>>, vector<1x512xf32>
    %60 = vector.broadcast %59 : vector<1x512xf32> to vector<16x512xf32>
    %61 = arith.mulf %15, %60 : vector<16x512xf32>
    %c7 = arith.constant 7 : index
    %c0_20 = arith.constant 0 : index
    %62 = vector.load %arg3[%c7, %c0_20] : memref<9x512xf32, #tpu.memory_space<vmem>>, vector<1x512xf32>
    %63 = vector.broadcast %62 : vector<1x512xf32> to vector<16x512xf32>
    %64 = arith.mulf %14, %63 : vector<16x512xf32>
    %65 = arith.addf %61, %64 : vector<16x512xf32>
    %c8 = arith.constant 8 : index
    %c0_21 = arith.constant 0 : index
    %66 = vector.load %arg3[%c8, %c0_21] : memref<9x512xf32, #tpu.memory_space<vmem>>, vector<1x512xf32>
    %67 = vector.broadcast %66 : vector<1x512xf32> to vector<16x512xf32>
    %68 = arith.mulf %16, %67 : vector<16x512xf32>
    %69 = arith.addf %65, %68 : vector<16x512xf32>
    %c15_i32_22 = arith.constant 15 : i32
    %70 = tpu.dynamic_rotate %69 by %c15_i32_22 dim 0 : vector<16x512xf32>, i32 -> vector<16x512xf32>
    %c1_i32_23 = arith.constant 1 : i32
    %71 = vector.broadcast %c1_i32_23 : i32 to vector<16x1xi32>
    %72 = arith.addi %19, %71 : vector<16x1xi32>
    %c0_i32_24 = arith.constant 0 : i32
    %73 = vector.broadcast %c0_i32_24 : i32 to vector<16x1xi32>
    %74 = arith.cmpi sge, %72, %73 : vector<16x1xi32>
    %c1_i32_25 = arith.constant 1 : i32
    %75 = vector.broadcast %c1_i32_25 : i32 to vector<16x1xi32>
    %76 = arith.addi %19, %75 : vector<16x1xi32>
    %c16_i32_26 = arith.constant 16 : i32
    %77 = vector.broadcast %c16_i32_26 : i32 to vector<16x1xi32>
    %78 = arith.cmpi slt, %76, %77 : vector<16x1xi32>
    %79 = arith.andi %74, %78 : vector<16x1xi1>
    %cst_27 = arith.constant 0.000000e+00 : f32
    %80 = vector.shape_cast %79 : vector<16x1xi1> to vector<16x1xi1>
    %81 = vector.broadcast %80 : vector<16x1xi1> to vector<16x512xi1>
    %82 = vector.broadcast %cst_27 : f32 to vector<16x512xf32>
    %83 = arith.select %81, %70, %82 : vector<16x512xi1>, vector<16x512xf32>
    %84 = arith.addf %58, %83 : vector<16x512xf32>
    %c1_28 = arith.constant 1 : index
    %c0_29 = arith.constant 0 : index
    %85 = vector.load %arg7[%c1_28, %c0_29] : memref<3x512xf32, #tpu.memory_space<vmem>>, vector<1x512xf32>
    %86 = vector.broadcast %85 : vector<1x512xf32> to vector<16x512xf32>
    %87 = arith.addf %84, %86 : vector<16x512xf32>
    %cst_30 = arith.constant 0.000000e+00 : f32
    %88 = vector.broadcast %cst_30 : f32 to vector<16x512xf32>
    %89 = arith.subf %88, %87 : vector<16x512xf32>
    %90 = math.exp %89 : vector<16x512xf32>
    %cst_31 = arith.constant 1.000000e+00 : f32
    %91 = vector.broadcast %cst_31 : f32 to vector<16x512xf32>
    %92 = arith.addf %91, %90 : vector<16x512xf32>
    %cst_32 = arith.constant 1.000000e+00 : f32
    %93 = vector.broadcast %cst_32 : f32 to vector<16x512xf32>
    %94 = arith.divf %93, %92 : vector<16x512xf32>
    %95 = arith.mulf %87, %94 : vector<16x512xf32>
    %c0_33 = arith.constant 0 : index
    %c0_34 = arith.constant 0 : index
    %96 = vector.load %arg4[%c0_33, %c0_34] : memref<512x128xf32, #tpu.memory_space<vmem>>, vector<512x128xf32>
    %cst_35 = arith.constant dense<0.000000e+00> : vector<16x128xf32>
    %97 = tpu.matmul %95, %96, %cst_35 {dimension_numbers = #tpu.dot_dimension_numbers<[1], [0], [0], [1], [0, 0, 1, 1], [], []>} : vector<16x512xf32>, vector<512x128xf32>, vector<16x128xf32> -> vector<16x128xf32>
    %cst_36 = arith.constant dense<0.000000e+00> : vector<128xf32>
    %98 = vector.multi_reduction <add>, %97, %cst_36 [0] : vector<16x128xf32> to vector<128xf32>
    %99 = vector.shape_cast %98 : vector<128xf32> to vector<1x128xf32>
    %c0_37 = arith.constant 0 : index
    %c0_38 = arith.constant 0 : index
    %100 = vector.load %arg9[%c0_37, %c0_38] : memref<1x128xf32, #tpu.memory_space<vmem>>, vector<1x128xf32>
    %101 = arith.addf %99, %100 : vector<1x128xf32>
    %cst_39 = arith.constant 0.000000e+00 : f32
    %102 = vector.broadcast %cst_39 : f32 to vector<1x128xf32>
    %103 = arith.subf %102, %101 : vector<1x128xf32>
    %104 = math.exp %103 : vector<1x128xf32>
    %cst_40 = arith.constant 1.000000e+00 : f32
    %105 = vector.broadcast %cst_40 : f32 to vector<1x128xf32>
    %106 = arith.addf %105, %104 : vector<1x128xf32>
    %cst_41 = arith.constant 1.000000e+00 : f32
    %107 = vector.broadcast %cst_41 : f32 to vector<1x128xf32>
    %108 = arith.divf %107, %106 : vector<1x128xf32>
    %109 = arith.mulf %101, %108 : vector<1x128xf32>
    %c0_42 = arith.constant 0 : index
    %c0_43 = arith.constant 0 : index
    %110 = vector.load %arg5[%c0_42, %c0_43] : memref<128x512xf32, #tpu.memory_space<vmem>>, vector<128x512xf32>
    %cst_44 = arith.constant dense<0.000000e+00> : vector<1x512xf32>
    %111 = tpu.matmul %109, %110, %cst_44 {dimension_numbers = #tpu.dot_dimension_numbers<[1], [0], [0], [1], [0, 0, 1, 1], [], []>} : vector<1x128xf32>, vector<128x512xf32>, vector<1x512xf32> -> vector<1x512xf32>
    %c2_45 = arith.constant 2 : index
    %c0_46 = arith.constant 0 : index
    %112 = vector.load %arg7[%c2_45, %c0_46] : memref<3x512xf32, #tpu.memory_space<vmem>>, vector<1x512xf32>
    %113 = arith.addf %111, %112 : vector<1x512xf32>
    %cst_47 = arith.constant 0.000000e+00 : f32
    %114 = vector.broadcast %cst_47 : f32 to vector<1x512xf32>
    %115 = arith.subf %114, %113 : vector<1x512xf32>
    %116 = math.exp %115 : vector<1x512xf32>
    %cst_48 = arith.constant 1.000000e+00 : f32
    %117 = vector.broadcast %cst_48 : f32 to vector<1x512xf32>
    %118 = arith.addf %117, %116 : vector<1x512xf32>
    %cst_49 = arith.constant 1.000000e+00 : f32
    %119 = vector.broadcast %cst_49 : f32 to vector<1x512xf32>
    %120 = arith.divf %119, %118 : vector<1x512xf32>
    %121 = vector.broadcast %120 : vector<1x512xf32> to vector<16x512xf32>
    %122 = arith.mulf %95, %121 : vector<16x512xf32>
    %c0_50 = arith.constant 0 : index
    %c0_51 = arith.constant 0 : index
    %123 = vector.load %arg6[%c0_50, %c0_51] : memref<512x128xf32, #tpu.memory_space<vmem>>, vector<512x128xf32>
    %cst_52 = arith.constant dense<0.000000e+00> : vector<16x128xf32>
    %124 = tpu.matmul %122, %123, %cst_52 {dimension_numbers = #tpu.dot_dimension_numbers<[1], [0], [0], [1], [0, 0, 1, 1], [], []>} : vector<16x512xf32>, vector<512x128xf32>, vector<16x128xf32> -> vector<16x128xf32>
    %c0_53 = arith.constant 0 : index
    %c0_54 = arith.constant 0 : index
    %125 = vector.load %arg8[%c0_53, %c0_54] : memref<1x128xf32, #tpu.memory_space<vmem>>, vector<1x128xf32>
    %126 = vector.broadcast %125 : vector<1x128xf32> to vector<16x128xf32>
    %127 = arith.addf %124, %126 : vector<16x128xf32>
    %128 = arith.addf %127, %1 : vector<16x128xf32>
    %129 = vector.shape_cast %128 : vector<16x128xf32> to vector<1x16x128xf32>
    %c0_55 = arith.constant 0 : index
    %c0_56 = arith.constant 0 : index
    %c0_57 = arith.constant 0 : index
    %130 = vector.load %arg10[%c0_55, %c0_56, %c0_57] : memref<1x16x128xf32, #tpu.memory_space<vmem>>, vector<1x16x128xf32>
    tpu.vector_store %arg10[%c0_55, %c0_56, %c0_57], %129 {strides = array<i32>} : memref<1x16x128xf32, #tpu.memory_space<vmem>>, vector<1x16x128xf32>,
    return
  }
  func.func @transform_0(%arg0: i32) -> (i32, i32, i32) {
    %c0_i32 = arith.constant 0 : i32
    %c0_i32_0 = arith.constant 0 : i32
    %c0_i32_1 = arith.constant 0 : i32
    return %arg0, %c0_i32, %c0_i32_0 : i32, i32, i32
  }
  func.func @transform_1(%arg0: i32) -> (i32, i32) {
    %c0_i32 = arith.constant 0 : i32
    %c0_i32_0 = arith.constant 0 : i32
    %c0_i32_1 = arith.constant 0 : i32
    return %c0_i32, %c0_i32_0 : i32, i32
  }
  func.func @transform_2(%arg0: i32) -> (i32, i32) {
    %c0_i32 = arith.constant 0 : i32
    %c0_i32_0 = arith.constant 0 : i32
    %c0_i32_1 = arith.constant 0 : i32
    return %c0_i32, %c0_i32_0 : i32, i32
  }
  func.func @transform_3(%arg0: i32) -> (i32, i32) {
    %c0_i32 = arith.constant 0 : i32
    %c0_i32_0 = arith.constant 0 : i32
    %c0_i32_1 = arith.constant 0 : i32
    return %c0_i32, %c0_i32_0 : i32, i32
  }
  func.func @transform_4(%arg0: i32) -> (i32, i32) {
    %c0_i32 = arith.constant 0 : i32
    %c0_i32_0 = arith.constant 0 : i32
    %c0_i32_1 = arith.constant 0 : i32
    return %c0_i32, %c0_i32_0 : i32, i32
  }
  func.func @transform_5(%arg0: i32) -> (i32, i32) {
    %c0_i32 = arith.constant 0 : i32
    %c0_i32_0 = arith.constant 0 : i32
    %c0_i32_1 = arith.constant 0 : i32
    return %c0_i32, %c0_i32_0 : i32, i32
  }
  func.func @transform_6(%arg0: i32) -> (i32, i32) {
    %c0_i32 = arith.constant 0 : i32
    %c0_i32_0 = arith.constant 0 : i32
    %c0_i32_1 = arith.constant 0 : i32
    return %c0_i32, %c0_i32_0 : i32, i32
  }
  func.func @transform_7(%arg0: i32) -> (i32, i32) {
    %c0_i32 = arith.constant 0 : i32
    %c0_i32_0 = arith.constant 0 : i32
    %c0_i32_1 = arith.constant 0 : i32
    return %c0_i32, %c0_i32_0 : i32, i32
  }
  func.func @transform_8(%arg0: i32) -> (i32, i32) {
    %c0_i32 = arith.constant 0 : i32
    %c0_i32_0 = arith.constant 0 : i32
    %c0_i32_1 = arith.constant 0 : i32
    return %c0_i32, %c0_i32_0 : i32, i32
  }
  func.func @transform_9(%arg0: i32) -> (i32, i32, i32) {
    %c0_i32 = arith.constant 0 : i32
    %c0_i32_0 = arith.constant 0 : i32
    %c0_i32_1 = arith.constant 0 : i32
    return %arg0, %c0_i32, %c0_i32_0 : i32, i32, i32
  }
}

</mosaic_0001>

<llo_original>
// kernel: tpu_custom_call.1
$region0: #{tpu_custom_call.1}
  #allocation0 [shape = 'u32[]', space=smem, size = 0x4, offset = 0x4, fixed_abs, tag = 'smem constant byte address 0x4 - core index']
  #allocation1 [shape = 'u32[144,128]{1,0:T(1,128)}', space=vmem, size = 0x12000, scoped, tag = 'internal scratch']
  %s0 = inlined_call_operand.hbm [shape: f32[2,16,128], index: 0, kind: input, shape index: {}]
  %s1 = inlined_call_operand.hbm [shape: f32[128,512], index: 1, kind: input, shape index: {}]
  %s2 = inlined_call_operand.hbm [shape: f32[9,512], index: 2, kind: input, shape index: {}]
  %s3 = inlined_call_operand.hbm [shape: f32[512,128], index: 3, kind: input, shape index: {}]
  %s4 = inlined_call_operand.hbm [shape: f32[128,512], index: 4, kind: input, shape index: {}]
  %s5 = inlined_call_operand.hbm [shape: f32[512,128], index: 5, kind: input, shape index: {}]
  %s6 = inlined_call_operand.vmem [shape: f32[3,512], index: 6, kind: input, shape index: {}]
  %s7 = inlined_call_operand.vmem [shape: f32[1,128], index: 7, kind: input, shape index: {}]
  %s8 = inlined_call_operand.vmem [shape: f32[1,128], index: 8, kind: input, shape index: {}]
  %s9 = inlined_call_operand.hbm [shape: f32[2,16,128], index: 9, kind: output, shape index: {}]
  %s10 = sld [smem:[#allocation0]]
  $region93: #{tpu_custom_call.1} parent=0
    _
  %s12 = ssub.s32 1, %s10
  %s13 = scalar_select 0, %s12, %s10
  $region1: #{tpu_custom_call.1} parent=0
    #allocation2 [shape = 'u8[16384]{0}', space=vmem, size = 0x4000, scoped, tag = 'input window, operand 0']
    #allocation3 [shape = 's32[2]{0}', space=sflag, size = 0x8, scoped, tag = 'scoped memory for tpu_custom_call.1']
    #allocation4 [shape = 's32[2]{0}', space=sflag, size = 0x8, scoped, tag = 'scoped memory for tpu_custom_call.1']
    #allocation5 [shape = 'u8[262144]{0}', space=vmem, size = 0x40000, scoped, tag = 'input window, operand 1, single buffered']
    #allocation6 [shape = 's32[1]{0}', space=sflag, size = 0x4, scoped, tag = 'scoped memory for tpu_custom_call.1']
    #allocation7 [shape = 'u8[32768]{0}', space=vmem, size = 0x8000, scoped, tag = 'input window, operand 2, single buffered']
    #allocation8 [shape = 'u8[262144]{0}', space=vmem, size = 0x40000, scoped, tag = 'input window, operand 3, single buffered']
    #allocation9 [shape = 's32[1]{0}', space=sflag, size = 0x4, scoped, tag = 'scoped memory for tpu_custom_call.1']
    #allocation10 [shape = 'u8[262144]{0}', space=vmem, size = 0x40000, scoped, tag = 'input window, operand 4, single buffered']
    #allocation11 [shape = 'u8[262144]{0}', space=vmem, size = 0x40000, scoped, tag = 'input window, operand 5, single buffered']
    #allocation12 [shape = 's32[1]{0}', space=sflag, size = 0x4, scoped, tag = 'scoped memory for tpu_custom_call.1']
    #allocation13 [shape = 'u8[16384]{0}', space=vmem, size = 0x4000, scoped, tag = 'output window, operand 0']
    %14 = vsyncpa [#allocation3], 0
    %s15 = scalar_lea.sflag [#allocation3], 1
    %16 = vsyncpa %s15, 0
    %17 = vsyncpa [#allocation6], 0
    %18 = vsyncpa [#allocation9], 0
    %19 = vsyncpa [#allocation12], 0
    %20 = vsyncpa [#allocation4], 0
    %s21 = scalar_lea.sflag [#allocation4], 1
    %22 = vsyncpa %s21, 0
    loop: start=0, step=1, limit=4
    $region2: #{tpu_custom_call.1} parent=1 // loop_pre_header
      _
    $region3: #{tpu_custom_call.1} parent=1 // loop_header
      %s24 = sphi 0, %s28
      %p25 = scmp.ge.s32.totalorder %s24, 4
      %s34 = sphi 0, %s36
      %s37 = sphi 0, %s34
      %s38 = sphi 0, %s37
      %s54 = sphi 0, %s38
      %s58 = sphi 0, %s58
      %s60 = sphi 0, %s58
      %s61 = sphi 0, %s60
      %s75 = sphi 0, %s61
      %s79 = sphi 0, %s79
      %s81 = sphi 0, %s79
      %s82 = sphi 0, %s81
      %s96 = sphi 0, %s82
      %s100 = sphi 0, %s100
      %s102 = sphi 0, %s100
      %s103 = sphi 0, %s102
      %s117 = sphi 0, %s103
      %s121 = sphi 0, %s121
      %s123 = sphi 0, %s121
      %s124 = sphi 0, %s123
      %s138 = sphi 0, %s124
      %s142 = sphi 0, %s142
      %s144 = sphi 0, %s142
      %s145 = sphi 0, %s144
      %s159 = sphi 0, %s145
      %s163 = sphi 0, %s163
      %s165 = sphi 0, %s163
      %s166 = sphi 0, %s165
      %s180 = sphi 0, %s166
      %s184 = sphi 0, %s184
      %s186 = sphi 0, %s184
      %s187 = sphi 0, %s186
      %s201 = sphi 0, %s187
      %s205 = sphi 0, %s205
      %s207 = sphi 0, %s205
      %s208 = sphi 0, %s207
      %s222 = sphi 0, %s208
      %s228 = sphi 0, %s230
      %s231 = sphi 0, %s228
      %s232 = sphi 0, %s231
      %s248 = sphi 0, %s232
    $region4: #{tpu_custom_call.1} parent=1 // loop_header_branch
      %27 = sbr.rel (%p25) target = $region8
    $region5: #{tpu_custom_call.1} parent=1 // loop_body
      %s29 = ssub.s32 %s24, 1
      %s30 = ssub.s32 %s24, 2
      %s31 = sadd.s32 %s24, 1
      %s32 = ssub.s32 %s24, %s31
      %p33 = scmp.eq.s32.totalorder %s32, 0
      %s35 = sadd.s32 %s34, 1
      %s36 = scalar_select %p33, %s34, %s35
      %p39 = pneg %p33
      %p40 = scmp.eq.s32.totalorder %s24, 1
      %p41 = por %p39, %p40
      %p42 = scmp.ne.s32.totalorder %s34, %s37
      %p43 = scmp.eq.s32.totalorder %s24, 0
      %p44 = por %p42, %p43
      %p45 = scmp.ne.s32.totalorder %s34, %s37
      %p46 = scmp.eq.s32.totalorder %s29, 1
      %p47 = por %p45, %p46
      %p48 = scmp.ne.s32.totalorder %s37, %s38
      %p49 = scmp.eq.s32.totalorder %s29, 0
      %p50 = por %p48, %p49
      %p51 = scmp.ne.s32.totalorder %s37, %s38
      %p52 = scmp.eq.s32.totalorder %s30, 1
      %p53 = por %p51, %p52
      %p55 = scmp.ne.s32.totalorder %s38, %s54
      %p56 = scmp.eq.s32.totalorder %s30, 0
      %p57 = por %p55, %p56
      %s59 = sadd.s32 %s58, 1
      %p62 = scmp.eq.s32.totalorder %s24, 1
      %p63 = scmp.ne.s32.totalorder %s58, %s60
      %p64 = scmp.eq.s32.totalorder %s24, 0
      %p65 = por %p63, %p64
      %p66 = scmp.ne.s32.totalorder %s58, %s60
      %p67 = scmp.eq.s32.totalorder %s29, 1
      %p68 = por %p66, %p67
      %p69 = scmp.ne.s32.totalorder %s60, %s61
      %p70 = scmp.eq.s32.totalorder %s29, 0
      %p71 = por %p69, %p70
      %p72 = scmp.ne.s32.totalorder %s60, %s61
      %p73 = scmp.eq.s32.totalorder %s30, 1
      %p74 = por %p72, %p73
      %p76 = scmp.ne.s32.totalorder %s61, %s75
      %p77 = scmp.eq.s32.totalorder %s30, 0
      %p78 = por %p76, %p77
      %s80 = sadd.s32 %s79, 1
      %p83 = scmp.eq.s32.totalorder %s24, 1
      %p84 = scmp.ne.s32.totalorder %s79, %s81
      %p85 = scmp.eq.s32.totalorder %s24, 0
      %p86 = por %p84, %p85
      %p87 = scmp.ne.s32.totalorder %s79, %s81
      %p88 = scmp.eq.s32.totalorder %s29, 1
      %p89 = por %p87, %p88
      %p90 = scmp.ne.s32.totalorder %s81, %s82
      %p91 = scmp.eq.s32.totalorder %s29, 0
      %p92 = por %p90, %p91
      %p93 = scmp.ne.s32.totalorder %s81, %s82
      %p94 = scmp.eq.s32.totalorder %s30, 1
      %p95 = por %p93, %p94
      %p97 = scmp.ne.s32.totalorder %s82, %s96
      %p98 = scmp.eq.s32.totalorder %s30, 0
      %p99 = por %p97, %p98
      %s101 = sadd.s32 %s100, 1
      %p104 = scmp.eq.s32.totalorder %s24, 1
      %p105 = scmp.ne.s32.totalorder %s100, %s102
      %p106 = scmp.eq.s32.totalorder %s24, 0
      %p107 = por %p105, %p106
      %p108 = scmp.ne.s32.totalorder %s100, %s102
      %p109 = scmp.eq.s32.totalorder %s29, 1
      %p110 = por %p108, %p109
      %p111 = scmp.ne.s32.totalorder %s102, %s103
      %p112 = scmp.eq.s32.totalorder %s29, 0
      %p113 = por %p111, %p112
      %p114 = scmp.ne.s32.totalorder %s102, %s103
      %p115 = scmp.eq.s32.totalorder %s30, 1
      %p116 = por %p114, %p115
      %p118 = scmp.ne.s32.totalorder %s103, %s117
      %p119 = scmp.eq.s32.totalorder %s30, 0
      %p120 = por %p118, %p119
      %s122 = sadd.s32 %s121, 1
      %p125 = scmp.eq.s32.totalorder %s24, 1
      %p126 = scmp.ne.s32.totalorder %s121, %s123
      %p127 = scmp.eq.s32.totalorder %s24, 0
      %p128 = por %p126, %p127
      %p129 = scmp.ne.s32.totalorder %s121, %s123
      %p130 = scmp.eq.s32.totalorder %s29, 1
      %p131 = por %p129, %p130
      %p132 = scmp.ne.s32.totalorder %s123, %s124
      %p133 = scmp.eq.s32.totalorder %s29, 0
      %p134 = por %p132, %p133
      %p135 = scmp.ne.s32.totalorder %s123, %s124
      %p136 = scmp.eq.s32.totalorder %s30, 1
      %p137 = por %p135, %p136
      %p139 = scmp.ne.s32.totalorder %s124, %s138
      %p140 = scmp.eq.s32.totalorder %s30, 0
      %p141 = por %p139, %p140
      %s143 = sadd.s32 %s142, 1
      %p146 = scmp.eq.s32.totalorder %s24, 1
      %p147 = scmp.ne.s32.totalorder %s142, %s144
      %p148 = scmp.eq.s32.totalorder %s24, 0
      %p149 = por %p147, %p148
      %p150 = scmp.ne.s32.totalorder %s142, %s144
      %p151 = scmp.eq.s32.totalorder %s29, 1
      %p152 = por %p150, %p151
      %p153 = scmp.ne.s32.totalorder %s144, %s145
      %p154 = scmp.eq.s32.totalorder %s29, 0
      %p155 = por %p153, %p154
      %p156 = scmp.ne.s32.totalorder %s144, %s145
      %p157 = scmp.eq.s32.totalorder %s30, 1
      %p158 = por %p156, %p157
      %p160 = scmp.ne.s32.totalorder %s145, %s159
      %p161 = scmp.eq.s32.totalorder %s30, 0
      %p162 = por %p160, %p161
      %s164 = sadd.s32 %s163, 1
      %p167 = scmp.eq.s32.totalorder %s24, 1
      %p168 = scmp.ne.s32.totalorder %s163, %s165
      %p169 = scmp.eq.s32.totalorder %s24, 0
      %p170 = por %p168, %p169
      %p171 = scmp.ne.s32.totalorder %s163, %s165
      %p172 = scmp.eq.s32.totalorder %s29, 1
      %p173 = por %p171, %p172
      %p174 = scmp.ne.s32.totalorder %s165, %s166
      %p175 = scmp.eq.s32.totalorder %s29, 0
      %p176 = por %p174, %p175
      %p177 = scmp.ne.s32.totalorder %s165, %s166
      %p178 = scmp.eq.s32.totalorder %s30, 1
      %p179 = por %p177, %p178
      %p181 = scmp.ne.s32.totalorder %s166, %s180
      %p182 = scmp.eq.s32.totalorder %s30, 0
      %p183 = por %p181, %p182
      %s185 = sadd.s32 %s184, 1
      %p188 = scmp.eq.s32.totalorder %s24, 1
      %p189 = scmp.ne.s32.totalorder %s184, %s186
      %p190 = scmp.eq.s32.totalorder %s24, 0
      %p191 = por %p189, %p190
      %p192 = scmp.ne.s32.totalorder %s184, %s186
      %p193 = scmp.eq.s32.totalorder %s29, 1
      %p194 = por %p192, %p193
      %p195 = scmp.ne.s32.totalorder %s186, %s187
      %p196 = scmp.eq.s32.totalorder %s29, 0
      %p197 = por %p195, %p196
      %p198 = scmp.ne.s32.totalorder %s186, %s187
      %p199 = scmp.eq.s32.totalorder %s30, 1
      %p200 = por %p198, %p199
      %p202 = scmp.ne.s32.totalorder %s187, %s201
      %p203 = scmp.eq.s32.totalorder %s30, 0
      %p204 = por %p202, %p203
      %s206 = sadd.s32 %s205, 1
      %p209 = scmp.eq.s32.totalorder %s24, 1
      %p210 = scmp.ne.s32.totalorder %s205, %s207
      %p211 = scmp.eq.s32.totalorder %s24, 0
      %p212 = por %p210, %p211
      %p213 = scmp.ne.s32.totalorder %s205, %s207
      %p214 = scmp.eq.s32.totalorder %s29, 1
      %p215 = por %p213, %p214
      %p216 = scmp.ne.s32.totalorder %s207, %s208
      %p217 = scmp.eq.s32.totalorder %s29, 0
      %p218 = por %p216, %p217
      %p219 = scmp.ne.s32.totalorder %s207, %s208
      %p220 = scmp.eq.s32.totalorder %s30, 1
      %p221 = por %p219, %p220
      %p223 = scmp.ne.s32.totalorder %s208, %s222
      %p224 = scmp.eq.s32.totalorder %s30, 0
      %p225 = por %p223, %p224
      %s226 = ssub.s32 %s24, %s31
      %p227 = scmp.eq.s32.totalorder %s226, 0
      %s229 = sadd.s32 %s228, 1
      %s230 = scalar_select %p227, %s228, %s229
      %p233 = pneg %p227
      %p234 = scmp.eq.s32.totalorder %s24, 1
      %p235 = por %p233, %p234
      %p236 = scmp.ne.s32.totalorder %s228, %s231
      %p237 = scmp.eq.s32.totalorder %s24, 0
      %p238 = por %p236, %p237
      %p239 = scmp.ne.s32.totalorder %s228, %s231
      %p240 = scmp.eq.s32.totalorder %s29, 1
      %p241 = por %p239, %p240
      %p242 = scmp.ne.s32.totalorder %s231, %s232
      %p243 = scmp.eq.s32.totalorder %s29, 0
      %p244 = por %p242, %p243
      %p245 = scmp.ne.s32.totalorder %s231, %s232
      %p246 = scmp.eq.s32.totalorder %s30, 1
      %p247 = por %p245, %p246
      %p249 = scmp.ne.s32.totalorder %s232, %s248
      %p250 = scmp.eq.s32.totalorder %s30, 0
      %p251 = por %p249, %p250
      %p252 = scmp.le.s32.totalorder 1, %s24
      %p253 = scmp.lt.s32.totalorder %s24, 3
      %p254 = pnand %p252, %p253
      %p255 = pneg %p254
      // Predicated region
      $region9: #{tpu_custom_call.1} parent=5 // pred_check
        _
      $region10: #{tpu_custom_call.1} parent=5 // pred_check_branch
        %257 = sbr.rel (%p254) target = $region12
      $region11: #{tpu_custom_call.1} parent=5 // pred_region
        %s258 = ssub.s32 %s24, 1
        // Predicated region
        $region13: #{tpu_custom_call.1} parent=11 // pred_check
          %p259 = pneg %p71
        $region14: #{tpu_custom_call.1} parent=11 // pred_check_branch
          %261 = sbr.rel (%p259) target = $region16
        $region15: #{tpu_custom_call.1} parent=11 // pred_region
          %s263 = ssub.s32 8192, 8192
          %264 = vsyncadd [#allocation6], %s263
          %s265 = sshll.u32 [#allocation5], 4
          %s266 = int_to_ptr.vmem [resolvable:$true] %s265
          %271 = dma.hbm_to_vmem [thread:$0]  %s1, 8192, %s266, [#allocation6], 512, 512, 32
        $region16: #{tpu_custom_call.1} parent=11 // pred_fallthru
          _
        // Predicated region
        $region17: #{tpu_custom_call.1} parent=11 // pred_check
          %p272 = pneg %p92
        $region18: #{tpu_custom_call.1} parent=11 // pred_check_branch
          %274 = sbr.rel (%p272) target = $region20
        $region19: #{tpu_custom_call.1} parent=11 // pred_region
          %s276 = ssub.s32 1024, 1024
          %277 = vsyncadd [#allocation6], %s276
          %s278 = sshll.u32 [#allocation7], 4
          %s279 = int_to_ptr.vmem [resolvable:$true] %s278
          %284 = dma.hbm_to_vmem [thread:$0]  %s2, 1024, %s279, [#allocation6], 512, 512, 32
        $region20: #{tpu_custom_call.1} parent=11 // pred_fallthru
          _
        // Predicated region
        $region21: #{tpu_custom_call.1} parent=11 // pred_check
          %p285 = pneg %p113
        $region22: #{tpu_custom_call.1} parent=11 // pred_check_branch
          %287 = sbr.rel (%p285) target = $region24
        $region23: #{tpu_custom_call.1} parent=11 // pred_region
          %s289 = ssub.s32 8192, 8192
          %290 = vsyncadd [#allocation9], %s289
          %s291 = sshll.u32 [#allocation8], 4
          %s292 = int_to_ptr.vmem [resolvable:$true] %s291
          %297 = dma.hbm_to_vmem [thread:$0]  %s3, 8192, %s292, [#allocation9], 128, 128, 8
        $region24: #{tpu_custom_call.1} parent=11 // pred_fallthru
          _
        // Predicated region
        $region25: #{tpu_custom_call.1} parent=11 // pred_check
          %p298 = pneg %p134
        $region26: #{tpu_custom_call.1} parent=11 // pred_check_branch
          %300 = sbr.rel (%p298) target = $region28
        $region27: #{tpu_custom_call.1} parent=11 // pred_region
          %s302 = ssub.s32 8192, 8192
          %303 = vsyncadd [#allocation9], %s302
          %s304 = sshll.u32 [#allocation10], 4
          %s305 = int_to_ptr.vmem [resolvable:$true] %s304
          %310 = dma.hbm_to_vmem [thread:$0]  %s4, 8192, %s305, [#allocation9], 512, 512, 32
        $region28: #{tpu_custom_call.1} parent=11 // pred_fallthru
          _
        // Predicated region
        $region29: #{tpu_custom_call.1} parent=11 // pred_check
          %p311 = pneg %p155
        $region30: #{tpu_custom_call.1} parent=11 // pred_check_branch
          %313 = sbr.rel (%p311) target = $region32
        $region31: #{tpu_custom_call.1} parent=11 // pred_region
          %s315 = ssub.s32 8192, 8192
          %316 = vsyncadd [#allocation12], %s315
          %s317 = sshll.u32 [#allocation11], 4
          %s318 = int_to_ptr.vmem [resolvable:$true] %s317
          %323 = dma.hbm_to_vmem [thread:$0]  %s5, 8192, %s318, [#allocation12], 128, 128, 8
        $region32: #{tpu_custom_call.1} parent=11 // pred_fallthru
          _
        // Predicated region
        $region33: #{tpu_custom_call.1} parent=11 // pred_check
          %p324 = pneg %p176
        $region34: #{tpu_custom_call.1} parent=11 // pred_check_branch
          %326 = sbr.rel (%p324) target = $region36
        $region35: #{tpu_custom_call.1} parent=11 // pred_region
          _
        $region36: #{tpu_custom_call.1} parent=11 // pred_fallthru
          _
        // Predicated region
        $region37: #{tpu_custom_call.1} parent=11 // pred_check
          %p327 = pneg %p197
        $region38: #{tpu_custom_call.1} parent=11 // pred_check_branch
          %329 = sbr.rel (%p327) target = $region40
        $region39: #{tpu_custom_call.1} parent=11 // pred_region
          _
        $region40: #{tpu_custom_call.1} parent=11 // pred_fallthru
          _
        // Predicated region
        $region41: #{tpu_custom_call.1} parent=11 // pred_check
          %p330 = pneg %p218
        $region42: #{tpu_custom_call.1} parent=11 // pred_check_branch
          %332 = sbr.rel (%p330) target = $region44
        $region43: #{tpu_custom_call.1} parent=11 // pred_region
          _
        $region44: #{tpu_custom_call.1} parent=11 // pred_fallthru
          _
      $region12: #{tpu_custom_call.1} parent=5 // pred_fallthru
        _
      %p333 = scmp.lt.s32.totalorder %s24, 2
      // Predicated region
      $region45: #{tpu_custom_call.1} parent=5 // pred_check
        %p334 = pneg %p333
      $region46: #{tpu_custom_call.1} parent=5 // pred_check_branch
        %336 = sbr.rel (%p334) target = $region48
      $region47: #{tpu_custom_call.1} parent=5 // pred_region
        // Predicated region
        $region49: #{tpu_custom_call.1} parent=47 // pred_check
          %p337 = pneg %p44
        $region50: #{tpu_custom_call.1} parent=47 // pred_check_branch
          %339 = sbr.rel (%p337) target = $region52
        $region51: #{tpu_custom_call.1} parent=47 // pred_region
          %s340 = sand.u32 %s34, 1
          %s341 = scalar_lea.sflag [#allocation3], %s340
          %s342 = sand.u32 %s34, 1
          %s343 = smul.addr %s342, 16
          %s344 = scalar_lea.vmem [#allocation2], %s343
          %s346 = ssub.s32 256, 256
          %347 = vsyncadd %s341, %s346
          %s348 = smul.addr %s24, 2
          %s349 = smul.addr %s348, 128
          %s350 = scalar_lea.hbm %s0, %s349
          %s351 = sshll.u32 %s344, 4
          %s352 = int_to_ptr.vmem [resolvable:$true] %s351
          %357 = dma.hbm_to_vmem [thread:$0]  %s350, 256, %s352, %s341, 128, 128, 8
        $region52: #{tpu_custom_call.1} parent=47 // pred_fallthru
          _
      $region48: #{tpu_custom_call.1} parent=5 // pred_fallthru
        _
      %p358 = scmp.le.s32.totalorder 1, %s24
      %p359 = scmp.lt.s32.totalorder %s24, 3
      %p360 = pnand %p358, %p359
      %p361 = pneg %p360
      // Predicated region
      $region53: #{tpu_custom_call.1} parent=5 // pred_check
        _
      $region54: #{tpu_custom_call.1} parent=5 // pred_check_branch
        %363 = sbr.rel (%p360) target = $region56
      $region55: #{tpu_custom_call.1} parent=5 // pred_region
        %s364 = ssub.s32 %s24, 1
        %s365 = sand.u32 %s37, 1
        %s366 = scalar_lea.sflag [#allocation3], %s365
        %s367 = sand.u32 %s37, 1
        %s368 = smul.addr %s367, 16
        %s369 = scalar_lea.vmem [#allocation2], %s368
        // Predicated region
        $region57: #{tpu_custom_call.1} parent=55 // pred_check
          %p370 = pneg %p50
        $region58: #{tpu_custom_call.1} parent=55 // pred_check_branch
          %372 = sbr.rel (%p370) target = $region60
        $region59: #{tpu_custom_call.1} parent=55 // pred_region
          %373 = dma.done %s366, 256
        $region60: #{tpu_custom_call.1} parent=55 // pred_fallthru
          _
        // Predicated region
        $region61: #{tpu_custom_call.1} parent=55 // pred_check
          %p374 = pneg %p71
        $region62: #{tpu_custom_call.1} parent=55 // pred_check_branch
          %376 = sbr.rel (%p374) target = $region64
        $region63: #{tpu_custom_call.1} parent=55 // pred_region
          %377 = dma.done [#allocation6], 8192
        $region64: #{tpu_custom_call.1} parent=55 // pred_fallthru
          _
        // Predicated region
        $region65: #{tpu_custom_call.1} parent=55 // pred_check
          %p378 = pneg %p92
        $region66: #{tpu_custom_call.1} parent=55 // pred_check_branch
          %380 = sbr.rel (%p378) target = $region68
        $region67: #{tpu_custom_call.1} parent=55 // pred_region
          %381 = dma.done [#allocation6], 1024
        $region68: #{tpu_custom_call.1} parent=55 // pred_fallthru
          _
        // Predicated region
        $region69: #{tpu_custom_call.1} parent=55 // pred_check
          %p382 = pneg %p113
        $region70: #{tpu_custom_call.1} parent=55 // pred_check_branch
          %384 = sbr.rel (%p382) target = $region72
        $region71: #{tpu_custom_call.1} parent=55 // pred_region
          %385 = dma.done [#allocation9], 8192
        $region72: #{tpu_custom_call.1} parent=55 // pred_fallthru
          _
        // Predicated region
        $region73: #{tpu_custom_call.1} parent=55 // pred_check
          %p386 = pneg %p134
        $region74: #{tpu_custom_call.1} parent=55 // pred_check_branch
          %388 = sbr.rel (%p386) target = $region76
        $region75: #{tpu_custom_call.1} parent=55 // pred_region
          %389 = dma.done [#allocation9], 8192
        $region76: #{tpu_custom_call.1} parent=55 // pred_fallthru
          _
        // Predicated region
        $region77: #{tpu_custom_call.1} parent=55 // pred_check
          %p390 = pneg %p155
        $region78: #{tpu_custom_call.1} parent=55 // pred_check_branch
          %392 = sbr.rel (%p390) target = $region80
        $region79: #{tpu_custom_call.1} parent=55 // pred_region
          %393 = dma.done [#allocation12], 8192
        $region80: #{tpu_custom_call.1} parent=55 // pred_fallthru
          _
        %s394 = sand.u32 %s37, 1
        %s395 = scalar_lea.sflag [#allocation3], %s394
        %s396 = sand.u32 %s37, 1
        %s397 = smul.addr %s396, 16
        %s398 = scalar_lea.vmem [#allocation2], %s397
        %p399 = pneg %p50
        %p400 = pneg %p47
        %p401 = pneg %p71
        %p402 = pneg %p68
        %p403 = pneg %p92
        %p404 = pneg %p89
        %p405 = pneg %p113
        %p406 = pneg %p110
        %p407 = pneg %p134
        %p408 = pneg %p131
        %p409 = pneg %p155
        %p410 = pneg %p152
        %p411 = pneg %p176
        %p412 = pneg %p173
        %p413 = pneg %p197
        %p414 = pneg %p194
        %p415 = pneg %p218
        %p416 = pneg %p215
        %p417 = pneg %p244
        %p418 = pneg %p241
        %s419 = sand.u32 %s231, 1
        %s420 = scalar_lea.sflag [#allocation4], %s419
        %s421 = sand.u32 %s231, 1
        %s422 = smul.addr %s421, 16
        %s423 = scalar_lea.vmem [#allocation13], %s422
        %v424 = vld [vmem:[%s369] sm:$0xff]
        %v425 = vld [vmem:[%s369 + $0x8] sm:$0xff]
        %v426 = vld [vmem:[#allocation5] sm:$0xff]
        %v427 = vld [vmem:[#allocation5 + $0x8] sm:$0xff]
        %v428 = vld [vmem:[#allocation5 + $0x10] sm:$0xff]
        %v429 = vld [vmem:[#allocation5 + $0x18] sm:$0xff]
        %v430 = vld [vmem:[#allocation5 + $0x20] sm:$0xff]
        %v431 = vld [vmem:[#allocation5 + $0x28] sm:$0xff]
        %v432 = vld [vmem:[#allocation5 + $0x30] sm:$0xff]
        %v433 = vld [vmem:[#allocation5 + $0x38] sm:$0xff]
        %v434 = vld [vmem:[#allocation5 + $0x40] sm:$0xff]
        %v435 = vld [vmem:[#allocation5 + $0x48] sm:$0xff]
        %v436 = vld [vmem:[#allocation5 + $0x50] sm:$0xff]
        %v437 = vld [vmem:[#allocation5 + $0x58] sm:$0xff]
        %v438 = vld [vmem:[#allocation5 + $0x60] sm:$0xff]
        %v439 = vld [vmem:[#allocation5 + $0x68] sm:$0xff]
        %v440 = vld [vmem:[#allocation5 + $0x70] sm:$0xff]
        %v441 = vld [vmem:[#allocation5 + $0x78] sm:$0xff]
        %v442 = vld [vmem:[#allocation5 + $0x80] sm:$0xff]
        %v443 = vld [vmem:[#allocation5 + $0x88] sm:$0xff]
        %v444 = vld [vmem:[#allocation5 + $0x90] sm:$0xff]
        %v445 = vld [vmem:[#allocation5 + $0x98] sm:$0xff]
        %v446 = vld [vmem:[#allocation5 + $0xa0] sm:$0xff]
        %v447 = vld [vmem:[#allocation5 + $0xa8] sm:$0xff]
        %v448 = vld [vmem:[#allocation5 + $0xb0] sm:$0xff]
        %v449 = vld [vmem:[#allocation5 + $0xb8] sm:$0xff]
        %v450 = vld [vmem:[#allocation5 + $0xc0] sm:$0xff]
        %v451 = vld [vmem:[#allocation5 + $0xc8] sm:$0xff]
        %v452 = vld [vmem:[#allocation5 + $0xd0] sm:$0xff]
        %v453 = vld [vmem:[#allocation5 + $0xd8] sm:$0xff]
        %v454 = vld [vmem:[#allocation5 + $0xe0] sm:$0xff]
        %v455 = vld [vmem:[#allocation5 + $0xe8] sm:$0xff]
        %v456 = vld [vmem:[#allocation5 + $0xf0] sm:$0xff]
        %v457 = vld [vmem:[#allocation5 + $0xf8] sm:$0xff]
        %v458 = vld [vmem:[#allocation5 + $0x100] sm:$0xff]
        %v459 = vld [vmem:[#allocation5 + $0x108] sm:$0xff]
        %v460 = vld [vmem:[#allocation5 + $0x110] sm:$0xff]
        %v461 = vld [vmem:[#allocation5 + $0x118] sm:$0xff]
        %v462 = vld [vmem:[#allocation5 + $0x120] sm:$0xff]
        %v463 = vld [vmem:[#allocation5 + $0x128] sm:$0xff]
        %v464 = vld [vmem:[#allocation5 + $0x130] sm:$0xff]
        %v465 = vld [vmem:[#allocation5 + $0x138] sm:$0xff]
        %v466 = vld [vmem:[#allocation5 + $0x140] sm:$0xff]
        %v467 = vld [vmem:[#allocation5 + $0x148] sm:$0xff]
        %v468 = vld [vmem:[#allocation5 + $0x150] sm:$0xff]
        %v469 = vld [vmem:[#allocation5 + $0x158] sm:$0xff]
        %v470 = vld [vmem:[#allocation5 + $0x160] sm:$0xff]
        %v471 = vld [vmem:[#allocation5 + $0x168] sm:$0xff]
        %v472 = vld [vmem:[#allocation5 + $0x170] sm:$0xff]
        %v473 = vld [vmem:[#allocation5 + $0x178] sm:$0xff]
        %v474 = vld [vmem:[#allocation5 + $0x180] sm:$0xff]
        %v475 = vld [vmem:[#allocation5 + $0x188] sm:$0xff]
        %v476 = vld [vmem:[#allocation5 + $0x190] sm:$0xff]
        %v477 = vld [vmem:[#allocation5 + $0x198] sm:$0xff]
        %v478 = vld [vmem:[#allocation5 + $0x1a0] sm:$0xff]
        %v479 = vld [vmem:[#allocation5 + $0x1a8] sm:$0xff]
        %v480 = vld [vmem:[#allocation5 + $0x1b0] sm:$0xff]
        %v481 = vld [vmem:[#allocation5 + $0x1b8] sm:$0xff]
        %v482 = vld [vmem:[#allocation5 + $0x1c0] sm:$0xff]
        %v483 = vld [vmem:[#allocation5 + $0x1c8] sm:$0xff]
        %v484 = vld [vmem:[#allocation5 + $0x1d0] sm:$0xff]
        %v485 = vld [vmem:[#allocation5 + $0x1d8] sm:$0xff]
        %v486 = vld [vmem:[#allocation5 + $0x1e0] sm:$0xff]
        %v487 = vld [vmem:[#allocation5 + $0x1e8] sm:$0xff]
        %v488 = vld [vmem:[#allocation5 + $0x1f0] sm:$0xff]
        %v489 = vld [vmem:[#allocation5 + $0x1f8] sm:$0xff]
        %v490 = vld [vmem:[%s6] ss:$4 sm:$0xf]
        %v492 = vlaneseq
        %v493 = vshrl.u32 %v492, 7
        %v494 = vsub.s32 0, %v493
        %v495 = vrot.slane %v490, %v494
        %v496 = vlaneseq
        %v497 = vshrl.u32 %v496, 7
        %v498 = vsub.s32 1, %v497
        %v499 = vrot.slane %v490, %v498
        %v500 = vlaneseq
        %v501 = vshrl.u32 %v500, 7
        %v502 = vsub.s32 2, %v501
        %v503 = vrot.slane %v490, %v502
        %v504 = vlaneseq
        %v505 = vshrl.u32 %v504, 7
        %v506 = vsub.s32 3, %v505
        %v507 = vrot.slane %v490, %v506
        %512 = vmatprep.subr.mxu0 %v427
        %513 = vmatpush1.msra.mxu0 %v426
        %514 = vmatprep.subr.mxu0 %v431
        %515 = vmatpush1.msra.mxu0 %v430
        %516 = vmatprep.subr.mxu0 %v435
        %517 = vmatpush1.msra.mxu0 %v434
        %518 = vmatprep.subr.mxu0 %v439
        %519 = vmatpush1.msra.mxu0 %v438
        %520 = vmatprep.subr.mxu0 %v443
        %521 = vmatpush1.msra.mxu0 %v442
        %522 = vmatprep.subr.mxu0 %v447
        %523 = vmatpush1.msra.mxu0 %v446
        %524 = vmatprep.subr.mxu0 %v451
        %525 = vmatpush1.msra.mxu0 %v450
        %526 = vmatprep.subr.mxu0 %v455
        %527 = vmatpush1.msra.mxu0 %v454
        %528 = vmatprep.subr.mxu0 %v459
        %529 = vmatpush1.msra.mxu0 %v458
        %530 = vmatprep.subr.mxu0 %v463
        %531 = vmatpush1.msra.mxu0 %v462
        %532 = vmatprep.subr.mxu0 %v467
        %533 = vmatpush1.msra.mxu0 %v466
        %534 = vmatprep.subr.mxu0 %v471
        %535 = vmatpush1.msra.mxu0 %v470
        %536 = vmatprep.subr.mxu0 %v475
        %537 = vmatpush1.msra.mxu0 %v474
        %538 = vmatprep.subr.mxu0 %v479
        %539 = vmatpush1.msra.mxu0 %v478
        %540 = vmatprep.subr.mxu0 %v483
        %541 = vmatpush1.msra.mxu0 %v482
        %542 = vmatprep.subr.mxu0 %v487
        %543 = vmatpush1.msra.mxu0 %v486
        %544 = vmatprep.subr.mxu0 0.0
        %545 = vmatpush1.msra.mxu0 0.0
        %546 = vmatprep.subr.mxu0 0.0
        %547 = vmatpush1.msra.mxu0 0.0
        %548 = vmatprep.subr.mxu0 0.0
        %549 = vmatpush1.msra.mxu0 0.0
        %550 = vmatprep.subr.mxu0 0.0
        %551 = vmatpush1.msra.mxu0 0.0
        %552 = vmatprep.subr.mxu0 0.0
        %553 = vmatpush1.msra.mxu0 0.0
        %554 = vmatprep.subr.mxu0 0.0
        %555 = vmatpush1.msra.mxu0 0.0
        %556 = vmatprep.subr.mxu0 0.0
        %557 = vmatpush1.msra.mxu0 0.0
        %558 = vmatprep.subr.mxu0 0.0
        %559 = vmatpush1.msra.mxu0 0.0
        %560 = vmatprep.subr.mxu0 0.0
        %561 = vmatpush1.msra.mxu0 0.0
        %562 = vmatprep.subr.mxu0 0.0
        %563 = vmatpush1.msra.mxu0 0.0
        %564 = vmatprep.subr.mxu0 0.0
        %565 = vmatpush1.msra.mxu0 0.0
        %566 = vmatprep.subr.mxu0 0.0
        %567 = vmatpush1.msra.mxu0 0.0
        %568 = vmatprep.subr.mxu0 0.0
        %569 = vmatpush1.msra.mxu0 0.0
        %570 = vmatprep.subr.mxu0 0.0
        %571 = vmatpush1.msra.mxu0 0.0
        %572 = vmatprep.subr.mxu0 0.0
        %573 = vmatpush1.msra.mxu0 0.0
        %574 = vmatprep.subr.mxu0 0.0
        %575 = vmatpush1.msra.mxu0 0.0
        %576 = vmatprep.mubr.f32.mxu0 0.0
        %577 = vmatmul.mubr.f32.gmra.mrb[0].mxu0 %v424
        %v578 = vpop.f32.mrb[0].mxu0
        %v579 = vadd.f32 %v495, %v578
        %v580 = vpop.f32.mrb[0].mxu0
        %v581 = vadd.f32 %v499, %v580
        %582 = vmatprep.mubr.f32.mxu0 0.0
        %583 = vmatmul.mubr.f32.gmra.mrb[0].mxu0 %v425
        %v584 = vpop.f32.mrb[0].mxu0
        %v585 = vadd.f32 %v495, %v584
        %v586 = vpop.f32.mrb[0].mxu0
        %v587 = vadd.f32 %v499, %v586
        %588 = vdwg.mxu0
        %589 = vmatprep.subr.mxu0 %v429
        %590 = vmatpush1.msra.mxu0 %v428
        %591 = vmatprep.subr.mxu0 %v433
        %592 = vmatpush1.msra.mxu0 %v432
        %593 = vmatprep.subr.mxu0 %v437
        %594 = vmatpush1.msra.mxu0 %v436
        %595 = vmatprep.subr.mxu0 %v441
        %596 = vmatpush1.msra.mxu0 %v440
        %597 = vmatprep.subr.mxu0 %v445
        %598 = vmatpush1.msra.mxu0 %v444
        %599 = vmatprep.subr.mxu0 %v449
        %600 = vmatpush1.msra.mxu0 %v448
        %601 = vmatprep.subr.mxu0 %v453
        %602 = vmatpush1.msra.mxu0 %v452
        %603 = vmatprep.subr.mxu0 %v457
        %604 = vmatpush1.msra.mxu0 %v456
        %605 = vmatprep.subr.mxu0 %v461
        %606 = vmatpush1.msra.mxu0 %v460
        %607 = vmatprep.subr.mxu0 %v465
        %608 = vmatpush1.msra.mxu0 %v464
        %609 = vmatprep.subr.mxu0 %v469
        %610 = vmatpush1.msra.mxu0 %v468
        %611 = vmatprep.subr.mxu0 %v473
        %612 = vmatpush1.msra.mxu0 %v472
        %613 = vmatprep.subr.mxu0 %v477
        %614 = vmatpush1.msra.mxu0 %v476
        %615 = vmatprep.subr.mxu0 %v481
        %616 = vmatpush1.msra.mxu0 %v480
        %617 = vmatprep.subr.mxu0 %v485
        %618 = vmatpush1.msra.mxu0 %v484
        %619 = vmatprep.subr.mxu0 %v489
        %620 = vmatpush1.msra.mxu0 %v488
        %621 = vmatprep.subr.mxu0 0.0
        %622 = vmatpush1.msra.mxu0 0.0
        %623 = vmatprep.subr.mxu0 0.0
        %624 = vmatpush1.msra.mxu0 0.0
        %625 = vmatprep.subr.mxu0 0.0
        %626 = vmatpush1.msra.mxu0 0.0
        %627 = vmatprep.subr.mxu0 0.0
        %628 = vmatpush1.msra.mxu0 0.0
        %629 = vmatprep.subr.mxu0 0.0
        %630 = vmatpush1.msra.mxu0 0.0
        %631 = vmatprep.subr.mxu0 0.0
        %632 = vmatpush1.msra.mxu0 0.0
        %633 = vmatprep.subr.mxu0 0.0
        %634 = vmatpush1.msra.mxu0 0.0
        %635 = vmatprep.subr.mxu0 0.0
        %636 = vmatpush1.msra.mxu0 0.0
        %637 = vmatprep.subr.mxu0 0.0
        %638 = vmatpush1.msra.mxu0 0.0
        %639 = vmatprep.subr.mxu0 0.0
        %640 = vmatpush1.msra.mxu0 0.0
        %641 = vmatprep.subr.mxu0 0.0
        %642 = vmatpush1.msra.mxu0 0.0
        %643 = vmatprep.subr.mxu0 0.0
        %644 = vmatpush1.msra.mxu0 0.0
        %645 = vmatprep.subr.mxu0 0.0
        %646 = vmatpush1.msra.mxu0 0.0
        %647 = vmatprep.subr.mxu0 0.0
        %648 = vmatpush1.msra.mxu0 0.0
        %649 = vmatprep.subr.mxu0 0.0
        %650 = vmatpush1.msra.mxu0 0.0
        %651 = vmatprep.subr.mxu0 0.0
        %652 = vmatpush1.msra.mxu0 0.0
        %653 = vmatprep.mubr.f32.mxu0 0.0
        %654 = vmatmul.mubr.f32.gmra.mrb[0].mxu0 %v424
        %v655 = vpop.f32.mrb[0].mxu0
        %v656 = vadd.f32 %v503, %v655
        %v657 = vpop.f32.mrb[0].mxu0
        %v658 = vadd.f32 %v507, %v657
        %659 = vmatprep.mubr.f32.mxu0 0.0
        %660 = vmatmul.mubr.f32.gmra.mrb[0].mxu0 %v425
        %v661 = vpop.f32.mrb[0].mxu0
        %v662 = vadd.f32 %v503, %v661
        %v663 = vpop.f32.mrb[0].mxu0
        %v664 = vadd.f32 %v507, %v663
        %665 = vdwg.mxu0
        %v666 = vsub.f32 0.0, %v579
        %v667 = vsub.f32 0.0, %v581
        %v668 = vsub.f32 0.0, %v656
        %v669 = vsub.f32 0.0, %v658
        %v670 = vsub.f32 0.0, %v585
        %v671 = vsub.f32 0.0, %v587
        %v672 = vsub.f32 0.0, %v662
        %v673 = vsub.f32 0.0, %v664
        %v674 = vmul.f32 %v666, 1.442695
        %v675 = vpow.pop %v674
        %v676 = vmul.f32 %v667, 1.442695
        %v677 = vpow.pop %v676
        %v678 = vmul.f32 %v668, 1.442695
        %v679 = vpow.pop %v678
        %v680 = vmul.f32 %v669, 1.442695
        %v681 = vpow.pop %v680
        %v682 = vmul.f32 %v670, 1.442695
        %v683 = vpow.pop %v682
        %v684 = vmul.f32 %v671, 1.442695
        %v685 = vpow.pop %v684
        %v686 = vmul.f32 %v672, 1.442695
        %v687 = vpow.pop %v686
        %v688 = vmul.f32 %v673, 1.442695
        %v689 = vpow.pop %v688
        %v690 = vadd.f32 %v675, 1.0
        %v691 = vadd.f32 %v677, 1.0
        %v692 = vadd.f32 %v679, 1.0
        %v693 = vadd.f32 %v681, 1.0
        %v694 = vadd.f32 %v683, 1.0
        %v695 = vadd.f32 %v685, 1.0
        %v696 = vadd.f32 %v687, 1.0
        %v697 = vadd.f32 %v689, 1.0
        %v698 = vrcp.pop %v690
        %v699 = vmul.f32 1.0, %v698
        %v700 = vrcp.pop %v691
        %v701 = vmul.f32 1.0, %v700
        %v702 = vrcp.pop %v692
        %v703 = vmul.f32 1.0, %v702
        %v704 = vrcp.pop %v693
        %v705 = vmul.f32 1.0, %v704
        %v706 = vrcp.pop %v694
        %v707 = vmul.f32 1.0, %v706
        %v708 = vrcp.pop %v695
        %v709 = vmul.f32 1.0, %v708
        %v710 = vrcp.pop %v696
        %v711 = vmul.f32 1.0, %v710
        %v712 = vrcp.pop %v697
        %v713 = vmul.f32 1.0, %v712
        %v714 = vmul.f32 %v579, %v699
        %v715 = vmul.f32 %v581, %v701
        %v716 = vmul.f32 %v656, %v703
        %v717 = vmul.f32 %v658, %v705
        %v718 = vmul.f32 %v585, %v707
        %v719 = vmul.f32 %v587, %v709
        %v720 = vmul.f32 %v662, %v711
        %v721 = vmul.f32 %v664, %v713
        %722 = vrot.lane.b32.xlu0 %v714, 32
        %v723 = vpop.permute.xlu0 %722
        %724 = vrot.lane.b32.xlu0 %v718, 32
        %v725 = vpop.permute.xlu0 %724
        %726 = vrot.lane.b32.xlu0 %v715, 32
        %v727 = vpop.permute.xlu0 %726
        %728 = vrot.lane.b32.xlu0 %v719, 32
        %v729 = vpop.permute.xlu0 %728
        %730 = vrot.lane.b32.xlu0 %v716, 32
        %v731 = vpop.permute.xlu0 %730
        %732 = vrot.lane.b32.xlu0 %v720, 32
        %v733 = vpop.permute.xlu0 %732
        %734 = vrot.lane.b32.xlu0 %v717, 32
        %v735 = vpop.permute.xlu0 %734
        %736 = vrot.lane.b32.xlu0 %v721, 32
        %v737 = vpop.permute.xlu0 %736
        %v738 = vlaneseq
        %v739 = vand.u32 %v738, 127
        %vm740 = vcmp.lt.s32.totalorder %v739, 32
        %v741 = vsel %vm740, %v731, %v735
        %v742 = vsel %vm740, %v733, %v737
        %v743 = vsel %vm740, %v727, %v731
        %v744 = vsel %vm740, %v729, %v733
        %v745 = vsel %vm740, %v723, %v727
        %v746 = vsel %vm740, %v725, %v729
        %v747 = vsel %vm740, %v735, %v723
        %v748 = vsel %vm740, %v737, %v725
        %749 = vrot.lane.b32.xlu0 %v714, 96
        %v750 = vpop.permute.xlu0 %749
        %751 = vrot.lane.b32.xlu0 %v718, 96
        %v752 = vpop.permute.xlu0 %751
        %753 = vrot.lane.b32.xlu0 %v715, 96
        %v754 = vpop.permute.xlu0 %753
        %755 = vrot.lane.b32.xlu0 %v719, 96
        %v756 = vpop.permute.xlu0 %755
        %757 = vrot.lane.b32.xlu0 %v716, 96
        %v758 = vpop.permute.xlu0 %757
        %759 = vrot.lane.b32.xlu0 %v720, 96
        %v760 = vpop.permute.xlu0 %759
        %761 = vrot.lane.b32.xlu0 %v717, 96
        %v762 = vpop.permute.xlu0 %761
        %763 = vrot.lane.b32.xlu0 %v721, 96
        %v764 = vpop.permute.xlu0 %763
        %vm765 = vcmp.lt.s32.totalorder %v739, 96
        %v766 = vsel %vm765, %v758, %v762
        %v767 = vsel %vm765, %v760, %v764
        %v768 = vsel %vm765, %v754, %v758
        %v769 = vsel %vm765, %v756, %v760
        %v770 = vsel %vm765, %v750, %v754
        %v771 = vsel %vm765, %v752, %v756
        %v772 = vsel %vm765, %v762, %v750
        %v773 = vsel %vm765, %v764, %v752
        %v774 = vlaneseq
        %v775 = vshrl.u32 %v774, 7
        %v776 = vadd.s32 %v775, 8
        %v777 = vand.u32 %v775, 15
        %v778 = vand.u32 %v776, 15
        %v779 = vld [vmem:[#allocation7] ss:$8 sm:$0xf]
        %v781 = vlaneseq
        %v782 = vshrl.u32 %v781, 7
        %v783 = vsub.s32 0, %v782
        %v784 = vrot.slane %v779, %v783
        %v785 = vlaneseq
        %v786 = vshrl.u32 %v785, 7
        %v787 = vsub.s32 1, %v786
        %v788 = vrot.slane %v779, %v787
        %v789 = vlaneseq
        %v790 = vshrl.u32 %v789, 7
        %v791 = vsub.s32 2, %v790
        %v792 = vrot.slane %v779, %v791
        %v793 = vlaneseq
        %v794 = vshrl.u32 %v793, 7
        %v795 = vsub.s32 3, %v794
        %v796 = vrot.slane %v779, %v795
        %v801 = vmul.f32 %v747, %v784
        %v802 = vmul.f32 %v745, %v788
        %v803 = vmul.f32 %v743, %v792
        %v804 = vmul.f32 %v741, %v796
        %v805 = vmul.f32 %v748, %v784
        %v806 = vmul.f32 %v746, %v788
        %v807 = vmul.f32 %v744, %v792
        %v808 = vmul.f32 %v742, %v796
        %s809 = scalar_lea.vmem [#allocation7], 1
        %v810 = vld [vmem:[%s809] ss:$8 sm:$0xf]
        %v812 = vlaneseq
        %v813 = vshrl.u32 %v812, 7
        %v814 = vsub.s32 0, %v813
        %v815 = vrot.slane %v810, %v814
        %v816 = vlaneseq
        %v817 = vshrl.u32 %v816, 7
        %v818 = vsub.s32 1, %v817
        %v819 = vrot.slane %v810, %v818
        %v820 = vlaneseq
        %v821 = vshrl.u32 %v820, 7
        %v822 = vsub.s32 2, %v821
        %v823 = vrot.slane %v810, %v822
        %v824 = vlaneseq
        %v825 = vshrl.u32 %v824, 7
        %v826 = vsub.s32 3, %v825
        %v827 = vrot.slane %v810, %v826
        %v832 = vmul.f32 %v714, %v815
        %v833 = vmul.f32 %v715, %v819
        %v834 = vmul.f32 %v716, %v823
        %v835 = vmul.f32 %v717, %v827
        %v836 = vmul.f32 %v718, %v815
        %v837 = vmul.f32 %v719, %v819
        %v838 = vmul.f32 %v720, %v823
        %v839 = vmul.f32 %v721, %v827
        %v840 = vadd.f32 %v801, %v832
        %v841 = vadd.f32 %v802, %v833
        %v842 = vadd.f32 %v803, %v834
        %v843 = vadd.f32 %v804, %v835
        %v844 = vadd.f32 %v805, %v836
        %v845 = vadd.f32 %v806, %v837
        %v846 = vadd.f32 %v807, %v838
        %v847 = vadd.f32 %v808, %v839
        %s848 = scalar_lea.vmem [#allocation7], 2
        %v849 = vld [vmem:[%s848] ss:$8 sm:$0xf]
        %v851 = vlaneseq
        %v852 = vshrl.u32 %v851, 7
        %v853 = vsub.s32 0, %v852
        %v854 = vrot.slane %v849, %v853
        %v855 = vlaneseq
        %v856 = vshrl.u32 %v855, 7
        %v857 = vsub.s32 1, %v856
        %v858 = vrot.slane %v849, %v857
        %v859 = vlaneseq
        %v860 = vshrl.u32 %v859, 7
        %v861 = vsub.s32 2, %v860
        %v862 = vrot.slane %v849, %v861
        %v863 = vlaneseq
        %v864 = vshrl.u32 %v863, 7
        %v865 = vsub.s32 3, %v864
        %v866 = vrot.slane %v849, %v865
        %v871 = vmul.f32 %v770, %v854
        %v872 = vmul.f32 %v768, %v858
        %v873 = vmul.f32 %v766, %v862
        %v874 = vmul.f32 %v772, %v866
        %v875 = vmul.f32 %v771, %v854
        %v876 = vmul.f32 %v769, %v858
        %v877 = vmul.f32 %v767, %v862
        %v878 = vmul.f32 %v773, %v866
        %v879 = vadd.f32 %v840, %v871
        %v880 = vadd.f32 %v841, %v872
        %v881 = vadd.f32 %v842, %v873
        %v882 = vadd.f32 %v843, %v874
        %v883 = vadd.f32 %v844, %v875
        %v884 = vadd.f32 %v845, %v876
        %v885 = vadd.f32 %v846, %v877
        %v886 = vadd.f32 %v847, %v878
        %v887 = vrot.slane %v879, 7
        %v888 = vrot.slane %v880, 7
        %v889 = vrot.slane %v881, 7
        %v890 = vrot.slane %v882, 7
        %v891 = vrot.slane %v883, 7
        %v892 = vrot.slane %v884, 7
        %v893 = vrot.slane %v885, 7
        %v894 = vrot.slane %v886, 7
        %vm895 = vcmp.lt.s32.totalorder %v775, 1
        %v896 = vsel %vm895, %v887, %v891
        %v897 = vsel %vm895, %v888, %v892
        %v898 = vsel %vm895, %v889, %v893
        %v899 = vsel %vm895, %v890, %v894
        %v900 = vsel %vm895, %v891, %v887
        %v901 = vsel %vm895, %v892, %v888
        %v902 = vsel %vm895, %v893, %v889
        %v903 = vsel %vm895, %v894, %v890
        %v904 = vadd.s32 %v777, 4294967295
        %v905 = vadd.s32 %v778, 4294967295
        %vm906 = vcmp.ge.s32.totalorder %v904, 0
        %vm907 = vcmp.ge.s32.totalorder %v905, 0
        %vm908 = vcmp.lt.s32.totalorder %v904, 16
        %vm909 = vcmp.lt.s32.totalorder %v905, 16
        %vm910 = vmand %vm906, %vm908
        %vm911 = vmand %vm907, %vm909
        %v912 = vsel %vm910, 1, 0
        %v913 = vsel %vm911, 1, 0
        %vm914 = vcmp.eq.s32.totalorder %v912, 1
        %vm915 = vcmp.eq.s32.totalorder %v913, 1
        %v916 = vsel %vm914, %v900, 0.0
        %v917 = vsel %vm914, %v901, 0.0
        %v918 = vsel %vm914, %v902, 0.0
        %v919 = vsel %vm914, %v903, 0.0
        %v920 = vsel %vm915, %v896, 0.0
        %v921 = vsel %vm915, %v897, 0.0
        %v922 = vsel %vm915, %v898, 0.0
        %v923 = vsel %vm915, %v899, 0.0
        %v924 = vadd.f32 %v916, 0.0
        %v925 = vadd.f32 %v917, 0.0
        %v926 = vadd.f32 %v918, 0.0
        %v927 = vadd.f32 %v919, 0.0
        %v928 = vadd.f32 %v920, 0.0
        %v929 = vadd.f32 %v921, 0.0
        %v930 = vadd.f32 %v922, 0.0
        %v931 = vadd.f32 %v923, 0.0
        %s932 = scalar_lea.vmem [#allocation7], 3
        %v933 = vld [vmem:[%s932] ss:$8 sm:$0xf]
        %v935 = vlaneseq
        %v936 = vshrl.u32 %v935, 7
        %v937 = vsub.s32 0, %v936
        %v938 = vrot.slane %v933, %v937
        %v939 = vlaneseq
        %v940 = vshrl.u32 %v939, 7
        %v941 = vsub.s32 1, %v940
        %v942 = vrot.slane %v933, %v941
        %v943 = vlaneseq
        %v944 = vshrl.u32 %v943, 7
        %v945 = vsub.s32 2, %v944
        %v946 = vrot.slane %v933, %v945
        %v947 = vlaneseq
        %v948 = vshrl.u32 %v947, 7
        %v949 = vsub.s32 3, %v948
        %v950 = vrot.slane %v933, %v949
        %v955 = vmul.f32 %v747, %v938
        %v956 = vmul.f32 %v745, %v942
        %v957 = vmul.f32 %v743, %v946
        %v958 = vmul.f32 %v741, %v950
        %v959 = vmul.f32 %v748, %v938
        %v960 = vmul.f32 %v746, %v942
        %v961 = vmul.f32 %v744, %v946
        %v962 = vmul.f32 %v742, %v950
        %s963 = scalar_lea.vmem [#allocation7], 4
        %v964 = vld [vmem:[%s963] ss:$8 sm:$0xf]
        %v966 = vlaneseq
        %v967 = vshrl.u32 %v966, 7
        %v968 = vsub.s32 0, %v967
        %v969 = vrot.slane %v964, %v968
        %v970 = vlaneseq
        %v971 = vshrl.u32 %v970, 7
        %v972 = vsub.s32 1, %v971
        %v973 = vrot.slane %v964, %v972
        %v974 = vlaneseq
        %v975 = vshrl.u32 %v974, 7
        %v976 = vsub.s32 2, %v975
        %v977 = vrot.slane %v964, %v976
        %v978 = vlaneseq
        %v979 = vshrl.u32 %v978, 7
        %v980 = vsub.s32 3, %v979
        %v981 = vrot.slane %v964, %v980
        %v986 = vmul.f32 %v714, %v969
        %v987 = vmul.f32 %v715, %v973
        %v988 = vmul.f32 %v716, %v977
        %v989 = vmul.f32 %v717, %v981
        %v990 = vmul.f32 %v718, %v969
        %v991 = vmul.f32 %v719, %v973
        %v992 = vmul.f32 %v720, %v977
        %v993 = vmul.f32 %v721, %v981
        %v994 = vadd.f32 %v955, %v986
        %v995 = vadd.f32 %v956, %v987
        %v996 = vadd.f32 %v957, %v988
        %v997 = vadd.f32 %v958, %v989
        %v998 = vadd.f32 %v959, %v990
        %v999 = vadd.f32 %v960, %v991
        %v1000 = vadd.f32 %v961, %v992
        %v1001 = vadd.f32 %v962, %v993
        %s1002 = scalar_lea.vmem [#allocation7], 5
        %v1003 = vld [vmem:[%s1002] ss:$8 sm:$0xf]
        %v1005 = vlaneseq
        %v1006 = vshrl.u32 %v1005, 7
        %v1007 = vsub.s32 0, %v1006
        %v1008 = vrot.slane %v1003, %v1007
        %v1009 = vlaneseq
        %v1010 = vshrl.u32 %v1009, 7
        %v1011 = vsub.s32 1, %v1010
        %v1012 = vrot.slane %v1003, %v1011
        %v1013 = vlaneseq
        %v1014 = vshrl.u32 %v1013, 7
        %v1015 = vsub.s32 2, %v1014
        %v1016 = vrot.slane %v1003, %v1015
        %v1017 = vlaneseq
        %v1018 = vshrl.u32 %v1017, 7
        %v1019 = vsub.s32 3, %v1018
        %v1020 = vrot.slane %v1003, %v1019
        %v1025 = vmul.f32 %v770, %v1008
        %v1026 = vmul.f32 %v768, %v1012
        %v1027 = vmul.f32 %v766, %v1016
        %v1028 = vmul.f32 %v772, %v1020
        %v1029 = vmul.f32 %v771, %v1008
        %v1030 = vmul.f32 %v769, %v1012
        %v1031 = vmul.f32 %v767, %v1016
        %v1032 = vmul.f32 %v773, %v1020
        %v1033 = vadd.f32 %v994, %v1025
        %v1034 = vadd.f32 %v995, %v1026
        %v1035 = vadd.f32 %v996, %v1027
        %v1036 = vadd.f32 %v997, %v1028
        %v1037 = vadd.f32 %v998, %v1029
        %v1038 = vadd.f32 %v999, %v1030
        %v1039 = vadd.f32 %v1000, %v1031
        %v1040 = vadd.f32 %v1001, %v1032
        %v1041 = vadd.f32 %v924, %v1033
        %v1042 = vadd.f32 %v925, %v1034
        %v1043 = vadd.f32 %v926, %v1035
        %v1044 = vadd.f32 %v927, %v1036
        %v1045 = vadd.f32 %v928, %v1037
        %v1046 = vadd.f32 %v929, %v1038
        %v1047 = vadd.f32 %v930, %v1039
        %v1048 = vadd.f32 %v931, %v1040
        %s1049 = scalar_lea.vmem [#allocation7], 6
        %v1050 = vld [vmem:[%s1049] ss:$8 sm:$0xf]
        %v1052 = vlaneseq
        %v1053 = vshrl.u32 %v1052, 7
        %v1054 = vsub.s32 0, %v1053
        %v1055 = vrot.slane %v1050, %v1054
        %v1056 = vlaneseq
        %v1057 = vshrl.u32 %v1056, 7
        %v1058 = vsub.s32 1, %v1057
        %v1059 = vrot.slane %v1050, %v1058
        %v1060 = vlaneseq
        %v1061 = vshrl.u32 %v1060, 7
        %v1062 = vsub.s32 2, %v1061
        %v1063 = vrot.slane %v1050, %v1062
        %v1064 = vlaneseq
        %v1065 = vshrl.u32 %v1064, 7
        %v1066 = vsub.s32 3, %v1065
        %v1067 = vrot.slane %v1050, %v1066
        %v1072 = vmul.f32 %v747, %v1055
        %v1073 = vmul.f32 %v745, %v1059
        %v1074 = vmul.f32 %v743, %v1063
        %v1075 = vmul.f32 %v741, %v1067
        %v1076 = vmul.f32 %v748, %v1055
        %v1077 = vmul.f32 %v746, %v1059
        %v1078 = vmul.f32 %v744, %v1063
        %v1079 = vmul.f32 %v742, %v1067
        %s1080 = scalar_lea.vmem [#allocation7], 7
        %v1081 = vld [vmem:[%s1080] ss:$8 sm:$0xf]
        %v1083 = vlaneseq
        %v1084 = vshrl.u32 %v1083, 7
        %v1085 = vsub.s32 0, %v1084
        %v1086 = vrot.slane %v1081, %v1085
        %v1087 = vlaneseq
        %v1088 = vshrl.u32 %v1087, 7
        %v1089 = vsub.s32 1, %v1088
        %v1090 = vrot.slane %v1081, %v1089
        %v1091 = vlaneseq
        %v1092 = vshrl.u32 %v1091, 7
        %v1093 = vsub.s32 2, %v1092
        %v1094 = vrot.slane %v1081, %v1093
        %v1095 = vlaneseq
        %v1096 = vshrl.u32 %v1095, 7
        %v1097 = vsub.s32 3, %v1096
        %v1098 = vrot.slane %v1081, %v1097
        %v1103 = vmul.f32 %v714, %v1086
        %v1104 = vmul.f32 %v715, %v1090
        %v1105 = vmul.f32 %v716, %v1094
        %v1106 = vmul.f32 %v717, %v1098
        %v1107 = vmul.f32 %v718, %v1086
        %v1108 = vmul.f32 %v719, %v1090
        %v1109 = vmul.f32 %v720, %v1094
        %v1110 = vmul.f32 %v721, %v1098
        %v1111 = vadd.f32 %v1072, %v1103
        %v1112 = vadd.f32 %v1073, %v1104
        %v1113 = vadd.f32 %v1074, %v1105
        %v1114 = vadd.f32 %v1075, %v1106
        %v1115 = vadd.f32 %v1076, %v1107
        %v1116 = vadd.f32 %v1077, %v1108
        %v1117 = vadd.f32 %v1078, %v1109
        %v1118 = vadd.f32 %v1079, %v1110
        %s1119 = scalar_lea.vmem [#allocation7], 32
        %v1120 = vld [vmem:[%s1119] ss:$8 sm:$0xf]
        %v1122 = vlaneseq
        %v1123 = vshrl.u32 %v1122, 7
        %v1124 = vsub.s32 0, %v1123
        %v1125 = vrot.slane %v1120, %v1124
        %v1126 = vlaneseq
        %v1127 = vshrl.u32 %v1126, 7
        %v1128 = vsub.s32 1, %v1127
        %v1129 = vrot.slane %v1120, %v1128
        %v1130 = vlaneseq
        %v1131 = vshrl.u32 %v1130, 7
        %v1132 = vsub.s32 2, %v1131
        %v1133 = vrot.slane %v1120, %v1132
        %v1134 = vlaneseq
        %v1135 = vshrl.u32 %v1134, 7
        %v1136 = vsub.s32 3, %v1135
        %v1137 = vrot.slane %v1120, %v1136
        %v1142 = vmul.f32 %v770, %v1125
        %v1143 = vmul.f32 %v768, %v1129
        %v1144 = vmul.f32 %v766, %v1133
        %v1145 = vmul.f32 %v772, %v1137
        %v1146 = vmul.f32 %v771, %v1125
        %v1147 = vmul.f32 %v769, %v1129
        %v1148 = vmul.f32 %v767, %v1133
        %v1149 = vmul.f32 %v773, %v1137
        %v1150 = vadd.f32 %v1111, %v1142
        %v1151 = vadd.f32 %v1112, %v1143
        %v1152 = vadd.f32 %v1113, %v1144
        %v1153 = vadd.f32 %v1114, %v1145
        %v1154 = vadd.f32 %v1115, %v1146
        %v1155 = vadd.f32 %v1116, %v1147
        %v1156 = vadd.f32 %v1117, %v1148
        %v1157 = vadd.f32 %v1118, %v1149
        %v1158 = vrot.slane %v1150, 1
        %v1159 = vrot.slane %v1151, 1
        %v1160 = vrot.slane %v1152, 1
        %v1161 = vrot.slane %v1153, 1
        %v1162 = vrot.slane %v1154, 1
        %v1163 = vrot.slane %v1155, 1
        %v1164 = vrot.slane %v1156, 1
        %v1165 = vrot.slane %v1157, 1
        %vm1166 = vcmp.lt.s32.totalorder %v775, 7
        %v1167 = vsel %vm1166, %v1158, %v1162
        %v1168 = vsel %vm1166, %v1159, %v1163
        %v1169 = vsel %vm1166, %v1160, %v1164
        %v1170 = vsel %vm1166, %v1161, %v1165
        %v1171 = vsel %vm1166, %v1162, %v1158
        %v1172 = vsel %vm1166, %v1163, %v1159
        %v1173 = vsel %vm1166, %v1164, %v1160
        %v1174 = vsel %vm1166, %v1165, %v1161
        %v1175 = vadd.s32 %v777, 1
        %v1176 = vadd.s32 %v778, 1
        %vm1177 = vcmp.ge.s32.totalorder %v1175, 0
        %vm1178 = vcmp.ge.s32.totalorder %v1176, 0
        %vm1179 = vcmp.lt.s32.totalorder %v1175, 16
        %vm1180 = vcmp.lt.s32.totalorder %v1176, 16
        %vm1181 = vmand %vm1177, %vm1179
        %vm1182 = vmand %vm1178, %vm1180
        %v1183 = vsel %vm1181, 1, 0
        %v1184 = vsel %vm1182, 1, 0
        %vm1185 = vcmp.eq.s32.totalorder %v1183, 1
        %vm1186 = vcmp.eq.s32.totalorder %v1184, 1
        %v1187 = vsel %vm1185, %v1167, 0.0
        %v1188 = vsel %vm1185, %v1168, 0.0
        %v1189 = vsel %vm1185, %v1169, 0.0
        %v1190 = vsel %vm1185, %v1170, 0.0
        %v1191 = vsel %vm1186, %v1171, 0.0
        %v1192 = vsel %vm1186, %v1172, 0.0
        %v1193 = vsel %vm1186, %v1173, 0.0
        %v1194 = vsel %vm1186, %v1174, 0.0
        %v1195 = vadd.f32 %v1041, %v1187
        %v1196 = vadd.f32 %v1042, %v1188
        %v1197 = vadd.f32 %v1043, %v1189
        %v1198 = vadd.f32 %v1044, %v1190
        %v1199 = vadd.f32 %v1045, %v1191
        %v1200 = vadd.f32 %v1046, %v1192
        %v1201 = vadd.f32 %v1047, %v1193
        %v1202 = vadd.f32 %v1048, %v1194
        %s1203 = scalar_lea.vmem %s6, 1
        %v1204 = vld [vmem:[%s1203] ss:$4 sm:$0xf]
        %v1206 = vlaneseq
        %v1207 = vshrl.u32 %v1206, 7
        %v1208 = vsub.s32 0, %v1207
        %v1209 = vrot.slane %v1204, %v1208
        %v1210 = vlaneseq
        %v1211 = vshrl.u32 %v1210, 7
        %v1212 = vsub.s32 1, %v1211
        %v1213 = vrot.slane %v1204, %v1212
        %v1214 = vlaneseq
        %v1215 = vshrl.u32 %v1214, 7
        %v1216 = vsub.s32 2, %v1215
        %v1217 = vrot.slane %v1204, %v1216
        %v1218 = vlaneseq
        %v1219 = vshrl.u32 %v1218, 7
        %v1220 = vsub.s32 3, %v1219
        %v1221 = vrot.slane %v1204, %v1220
        %v1226 = vadd.f32 %v1195, %v1209
        %v1227 = vadd.f32 %v1196, %v1213
        %v1228 = vadd.f32 %v1197, %v1217
        %v1229 = vadd.f32 %v1198, %v1221
        %v1230 = vadd.f32 %v1199, %v1209
        %v1231 = vadd.f32 %v1200, %v1213
        %v1232 = vadd.f32 %v1201, %v1217
        %v1233 = vadd.f32 %v1202, %v1221
        %v1234 = vsub.f32 0.0, %v1226
        %v1235 = vsub.f32 0.0, %v1227
        %v1236 = vsub.f32 0.0, %v1228
        %v1237 = vsub.f32 0.0, %v1229
        %v1238 = vsub.f32 0.0, %v1230
        %v1239 = vsub.f32 0.0, %v1231
        %v1240 = vsub.f32 0.0, %v1232
        %v1241 = vsub.f32 0.0, %v1233
        %v1242 = vmul.f32 %v1234, 1.442695
        %v1243 = vpow.pop %v1242
        %v1244 = vmul.f32 %v1235, 1.442695
        %v1245 = vpow.pop %v1244
        %v1246 = vmul.f32 %v1236, 1.442695
        %v1247 = vpow.pop %v1246
        %v1248 = vmul.f32 %v1237, 1.442695
        %v1249 = vpow.pop %v1248
        %v1250 = vmul.f32 %v1238, 1.442695
        %v1251 = vpow.pop %v1250
        %v1252 = vmul.f32 %v1239, 1.442695
        %v1253 = vpow.pop %v1252
        %v1254 = vmul.f32 %v1240, 1.442695
        %v1255 = vpow.pop %v1254
        %v1256 = vmul.f32 %v1241, 1.442695
        %v1257 = vpow.pop %v1256
        %v1258 = vadd.f32 %v1243, 1.0
        %v1259 = vadd.f32 %v1245, 1.0
        %v1260 = vadd.f32 %v1247, 1.0
        %v1261 = vadd.f32 %v1249, 1.0
        %v1262 = vadd.f32 %v1251, 1.0
        %v1263 = vadd.f32 %v1253, 1.0
        %v1264 = vadd.f32 %v1255, 1.0
        %v1265 = vadd.f32 %v1257, 1.0
        %v1266 = vrcp.pop %v1258
        %v1267 = vmul.f32 1.0, %v1266
        %v1268 = vrcp.pop %v1259
        %v1269 = vmul.f32 1.0, %v1268
        %v1270 = vrcp.pop %v1260
        %v1271 = vmul.f32 1.0, %v1270
        %v1272 = vrcp.pop %v1261
        %v1273 = vmul.f32 1.0, %v1272
        %v1274 = vrcp.pop %v1262
        %v1275 = vmul.f32 1.0, %v1274
        %v1276 = vrcp.pop %v1263
        %v1277 = vmul.f32 1.0, %v1276
        %v1278 = vrcp.pop %v1264
        %v1279 = vmul.f32 1.0, %v1278
        %v1280 = vrcp.pop %v1265
        %v1281 = vmul.f32 1.0, %v1280
        %v1282 = vmul.f32 %v1226, %v1267
        %v1283 = vmul.f32 %v1227, %v1269
        %v1284 = vmul.f32 %v1228, %v1271
        %v1285 = vmul.f32 %v1229, %v1273
        %v1286 = vmul.f32 %v1230, %v1275
        %v1287 = vmul.f32 %v1231, %v1277
        %v1288 = vmul.f32 %v1232, %v1279
        %v1289 = vmul.f32 %v1233, %v1281
        %v1290 = vld [vmem:[#allocation8] sm:$0xff]
        %v1291 = vld [vmem:[#allocation8 + $0x8] sm:$0xff]
        %v1292 = vld [vmem:[#allocation8 + $0x10] sm:$0xff]
        %v1293 = vld [vmem:[#allocation8 + $0x18] sm:$0xff]
        %v1294 = vld [vmem:[#allocation8 + $0x20] sm:$0xff]
        %v1295 = vld [vmem:[#allocation8 + $0x28] sm:$0xff]
        %v1296 = vld [vmem:[#allocation8 + $0x30] sm:$0xff]
        %v1297 = vld [vmem:[#allocation8 + $0x38] sm:$0xff]
        %v1298 = vld [vmem:[#allocation8 + $0x40] sm:$0xff]
        %v1299 = vld [vmem:[#allocation8 + $0x48] sm:$0xff]
        %v1300 = vld [vmem:[#allocation8 + $0x50] sm:$0xff]
        %v1301 = vld [vmem:[#allocation8 + $0x58] sm:$0xff]
        %v1302 = vld [vmem:[#allocation8 + $0x60] sm:$0xff]
        %v1303 = vld [vmem:[#allocation8 + $0x68] sm:$0xff]
        %v1304 = vld [vmem:[#allocation8 + $0x70] sm:$0xff]
        %v1305 = vld [vmem:[#allocation8 + $0x78] sm:$0xff]
        %v1306 = vld [vmem:[#allocation8 + $0x80] sm:$0xff]
        %v1307 = vld [vmem:[#allocation8 + $0x88] sm:$0xff]
        %v1308 = vld [vmem:[#allocation8 + $0x90] sm:$0xff]
        %v1309 = vld [vmem:[#allocation8 + $0x98] sm:$0xff]
        %v1310 = vld [vmem:[#allocation8 + $0xa0] sm:$0xff]
        %v1311 = vld [vmem:[#allocation8 + $0xa8] sm:$0xff]
        %v1312 = vld [vmem:[#allocation8 + $0xb0] sm:$0xff]
        %v1313 = vld [vmem:[#allocation8 + $0xb8] sm:$0xff]
        %v1314 = vld [vmem:[#allocation8 + $0xc0] sm:$0xff]
        %v1315 = vld [vmem:[#allocation8 + $0xc8] sm:$0xff]
        %v1316 = vld [vmem:[#allocation8 + $0xd0] sm:$0xff]
        %v1317 = vld [vmem:[#allocation8 + $0xd8] sm:$0xff]
        %v1318 = vld [vmem:[#allocation8 + $0xe0] sm:$0xff]
        %v1319 = vld [vmem:[#allocation8 + $0xe8] sm:$0xff]
        %v1320 = vld [vmem:[#allocation8 + $0xf0] sm:$0xff]
        %v1321 = vld [vmem:[#allocation8 + $0xf8] sm:$0xff]
        %v1322 = vld [vmem:[#allocation8 + $0x100] sm:$0xff]
        %v1323 = vld [vmem:[#allocation8 + $0x108] sm:$0xff]
        %v1324 = vld [vmem:[#allocation8 + $0x110] sm:$0xff]
        %v1325 = vld [vmem:[#allocation8 + $0x118] sm:$0xff]
        %v1326 = vld [vmem:[#allocation8 + $0x120] sm:$0xff]
        %v1327 = vld [vmem:[#allocation8 + $0x128] sm:$0xff]
        %v1328 = vld [vmem:[#allocation8 + $0x130] sm:$0xff]
        %v1329 = vld [vmem:[#allocation8 + $0x138] sm:$0xff]
        %v1330 = vld [vmem:[#allocation8 + $0x140] sm:$0xff]
        %v1331 = vld [vmem:[#allocation8 + $0x148] sm:$0xff]
        %v1332 = vld [vmem:[#allocation8 + $0x150] sm:$0xff]
        %v1333 = vld [vmem:[#allocation8 + $0x158] sm:$0xff]
        %v1334 = vld [vmem:[#allocation8 + $0x160] sm:$0xff]
        %v1335 = vld [vmem:[#allocation8 + $0x168] sm:$0xff]
        %v1336 = vld [vmem:[#allocation8 + $0x170] sm:$0xff]
        %v1337 = vld [vmem:[#allocation8 + $0x178] sm:$0xff]
        %v1338 = vld [vmem:[#allocation8 + $0x180] sm:$0xff]
        %v1339 = vld [vmem:[#allocation8 + $0x188] sm:$0xff]
        %v1340 = vld [vmem:[#allocation8 + $0x190] sm:$0xff]
        %v1341 = vld [vmem:[#allocation8 + $0x198] sm:$0xff]
        %v1342 = vld [vmem:[#allocation8 + $0x1a0] sm:$0xff]
        %v1343 = vld [vmem:[#allocation8 + $0x1a8] sm:$0xff]
        %v1344 = vld [vmem:[#allocation8 + $0x1b0] sm:$0xff]
        %v1345 = vld [vmem:[#allocation8 + $0x1b8] sm:$0xff]
        %v1346 = vld [vmem:[#allocation8 + $0x1c0] sm:$0xff]
        %v1347 = vld [vmem:[#allocation8 + $0x1c8] sm:$0xff]
        %v1348 = vld [vmem:[#allocation8 + $0x1d0] sm:$0xff]
        %v1349 = vld [vmem:[#allocation8 + $0x1d8] sm:$0xff]
        %v1350 = vld [vmem:[#allocation8 + $0x1e0] sm:$0xff]
        %v1351 = vld [vmem:[#allocation8 + $0x1e8] sm:$0xff]
        %v1352 = vld [vmem:[#allocation8 + $0x1f0] sm:$0xff]
        %v1353 = vld [vmem:[#allocation8 + $0x1f8] sm:$0xff]
        %1354 = vmatprep.subr.mxu0 0.0
        %1355 = vmatpush1.msra.mxu0 %v1290
        %1356 = vmatprep.subr.mxu0 0.0
        %1357 = vmatpush1.msra.mxu0 %v1291
        %1358 = vmatprep.subr.mxu0 0.0
        %1359 = vmatpush1.msra.mxu0 %v1292
        %1360 = vmatprep.subr.mxu0 0.0
        %1361 = vmatpush1.msra.mxu0 %v1293
        %1362 = vmatprep.subr.mxu0 0.0
        %1363 = vmatpush1.msra.mxu0 %v1294
        %1364 = vmatprep.subr.mxu0 0.0
        %1365 = vmatpush1.msra.mxu0 %v1295
        %1366 = vmatprep.subr.mxu0 0.0
        %1367 = vmatpush1.msra.mxu0 %v1296
        %1368 = vmatprep.subr.mxu0 0.0
        %1369 = vmatpush1.msra.mxu0 %v1297
        %1370 = vmatprep.subr.mxu0 0.0
        %1371 = vmatpush1.msra.mxu0 %v1298
        %1372 = vmatprep.subr.mxu0 0.0
        %1373 = vmatpush1.msra.mxu0 %v1299
        %1374 = vmatprep.subr.mxu0 0.0
        %1375 = vmatpush1.msra.mxu0 %v1300
        %1376 = vmatprep.subr.mxu0 0.0
        %1377 = vmatpush1.msra.mxu0 %v1301
        %1378 = vmatprep.subr.mxu0 0.0
        %1379 = vmatpush1.msra.mxu0 %v1302
        %1380 = vmatprep.subr.mxu0 0.0
        %1381 = vmatpush1.msra.mxu0 %v1303
        %1382 = vmatprep.subr.mxu0 0.0
        %1383 = vmatpush1.msra.mxu0 %v1304
        %1384 = vmatprep.subr.mxu0 0.0
        %1385 = vmatpush1.msra.mxu0 %v1305
        %1386 = vmatprep.subr.mxu0 0.0
        %1387 = vmatpush1.msra.mxu0 %v1306
        %1388 = vmatprep.subr.mxu0 0.0
        %1389 = vmatpush1.msra.mxu0 %v1307
        %1390 = vmatprep.subr.mxu0 0.0
        %1391 = vmatpush1.msra.mxu0 %v1308
        %1392 = vmatprep.subr.mxu0 0.0
        %1393 = vmatpush1.msra.mxu0 %v1309
        %1394 = vmatprep.subr.mxu0 0.0
        %1395 = vmatpush1.msra.mxu0 %v1310
        %1396 = vmatprep.subr.mxu0 0.0
        %1397 = vmatpush1.msra.mxu0 %v1311
        %1398 = vmatprep.subr.mxu0 0.0
        %1399 = vmatpush1.msra.mxu0 %v1312
        %1400 = vmatprep.subr.mxu0 0.0
        %1401 = vmatpush1.msra.mxu0 %v1313
        %1402 = vmatprep.subr.mxu0 0.0
        %1403 = vmatpush1.msra.mxu0 %v1314
        %1404 = vmatprep.subr.mxu0 0.0
        %1405 = vmatpush1.msra.mxu0 %v1315
        %1406 = vmatprep.subr.mxu0 0.0
        %1407 = vmatpush1.msra.mxu0 %v1316
        %1408 = vmatprep.subr.mxu0 0.0
        %1409 = vmatpush1.msra.mxu0 %v1317
        %1410 = vmatprep.subr.mxu0 0.0
        %1411 = vmatpush1.msra.mxu0 %v1318
        %1412 = vmatprep.subr.mxu0 0.0
        %1413 = vmatpush1.msra.mxu0 %v1319
        %1414 = vmatprep.subr.mxu0 0.0
        %1415 = vmatpush1.msra.mxu0 %v1320
        %1416 = vmatprep.subr.mxu0 0.0
        %1417 = vmatpush1.msra.mxu0 %v1321
        %1418 = vmatprep.mubr.f32.mxu0 %v1283
        %1419 = vmatmul.mubr.f32.gmra.mrb[0].mxu0 %v1282
        %v1420 = vpop.f32.mrb[0].mxu0
        %v1421 = vadd.f32 0.0, %v1420
        %v1422 = vpop.f32.mrb[0].mxu0
        %1423 = vmatprep.mubr.f32.mxu0 %v1287
        %1424 = vmatmul.mubr.f32.gmra.mrb[0].mxu0 %v1286
        %v1425 = vpop.f32.mrb[0].mxu0
        %v1426 = vadd.f32 0.0, %v1425
        %v1427 = vpop.f32.mrb[0].mxu0
        %1428 = vdwg.mxu0
        %1429 = vmatprep.subr.mxu0 0.0
        %1430 = vmatpush1.msra.mxu0 %v1322
        %1431 = vmatprep.subr.mxu0 0.0
        %1432 = vmatpush1.msra.mxu0 %v1323
        %1433 = vmatprep.subr.mxu0 0.0
        %1434 = vmatpush1.msra.mxu0 %v1324
        %1435 = vmatprep.subr.mxu0 0.0
        %1436 = vmatpush1.msra.mxu0 %v1325
        %1437 = vmatprep.subr.mxu0 0.0
        %1438 = vmatpush1.msra.mxu0 %v1326
        %1439 = vmatprep.subr.mxu0 0.0
        %1440 = vmatpush1.msra.mxu0 %v1327
        %1441 = vmatprep.subr.mxu0 0.0
        %1442 = vmatpush1.msra.mxu0 %v1328
        %1443 = vmatprep.subr.mxu0 0.0
        %1444 = vmatpush1.msra.mxu0 %v1329
        %1445 = vmatprep.subr.mxu0 0.0
        %1446 = vmatpush1.msra.mxu0 %v1330
        %1447 = vmatprep.subr.mxu0 0.0
        %1448 = vmatpush1.msra.mxu0 %v1331
        %1449 = vmatprep.subr.mxu0 0.0
        %1450 = vmatpush1.msra.mxu0 %v1332
        %1451 = vmatprep.subr.mxu0 0.0
        %1452 = vmatpush1.msra.mxu0 %v1333
        %1453 = vmatprep.subr.mxu0 0.0
        %1454 = vmatpush1.msra.mxu0 %v1334
        %1455 = vmatprep.subr.mxu0 0.0
        %1456 = vmatpush1.msra.mxu0 %v1335
        %1457 = vmatprep.subr.mxu0 0.0
        %1458 = vmatpush1.msra.mxu0 %v1336
        %1459 = vmatprep.subr.mxu0 0.0
        %1460 = vmatpush1.msra.mxu0 %v1337
        %1461 = vmatprep.subr.mxu0 0.0
        %1462 = vmatpush1.msra.mxu0 %v1338
        %1463 = vmatprep.subr.mxu0 0.0
        %1464 = vmatpush1.msra.mxu0 %v1339
        %1465 = vmatprep.subr.mxu0 0.0
        %1466 = vmatpush1.msra.mxu0 %v1340
        %1467 = vmatprep.subr.mxu0 0.0
        %1468 = vmatpush1.msra.mxu0 %v1341
        %1469 = vmatprep.subr.mxu0 0.0
        %1470 = vmatpush1.msra.mxu0 %v1342
        %1471 = vmatprep.subr.mxu0 0.0
        %1472 = vmatpush1.msra.mxu0 %v1343
        %1473 = vmatprep.subr.mxu0 0.0
        %1474 = vmatpush1.msra.mxu0 %v1344
        %1475 = vmatprep.subr.mxu0 0.0
        %1476 = vmatpush1.msra.mxu0 %v1345
        %1477 = vmatprep.subr.mxu0 0.0
        %1478 = vmatpush1.msra.mxu0 %v1346
        %1479 = vmatprep.subr.mxu0 0.0
        %1480 = vmatpush1.msra.mxu0 %v1347
        %1481 = vmatprep.subr.mxu0 0.0
        %1482 = vmatpush1.msra.mxu0 %v1348
        %1483 = vmatprep.subr.mxu0 0.0
        %1484 = vmatpush1.msra.mxu0 %v1349
        %1485 = vmatprep.subr.mxu0 0.0
        %1486 = vmatpush1.msra.mxu0 %v1350
        %1487 = vmatprep.subr.mxu0 0.0
        %1488 = vmatpush1.msra.mxu0 %v1351
        %1489 = vmatprep.subr.mxu0 0.0
        %1490 = vmatpush1.msra.mxu0 %v1352
        %1491 = vmatprep.subr.mxu0 0.0
        %1492 = vmatpush1.msra.mxu0 %v1353
        %1493 = vmatprep.mubr.f32.mxu0 %v1285
        %1494 = vmatmul.mubr.f32.gmra.mrb[0].mxu0 %v1284
        %v1495 = vpop.f32.mrb[0].mxu0
        %v1496 = vadd.f32 %v1421, %v1495
        %v1497 = vpop.f32.mrb[0].mxu0
        %1498 = vmatprep.mubr.f32.mxu0 %v1289
        %1499 = vmatmul.mubr.f32.gmra.mrb[0].mxu0 %v1288
        %v1500 = vpop.f32.mrb[0].mxu0
        %v1501 = vadd.f32 %v1426, %v1500
        %v1502 = vpop.f32.mrb[0].mxu0
        %1503 = vdwg.mxu0
        %v1504 = vadd.f32 %v1496, %v1501
        %v1505 = vrot.slane %v1504, 4
        %v1506 = vadd.f32 %v1504, %v1505
        %v1507 = vrot.slane %v1506, 2
        %v1508 = vadd.f32 %v1506, %v1507
        %v1509 = vrot.slane %v1508, 1
        %v1510 = vadd.f32 %v1508, %v1509
        %v1511 = vld [vmem:[%s8] sm:$0x1]
        %v1512 = vadd.f32 %v1510, %v1511
        %v1513 = vsub.f32 0.0, %v1512
        %v1514 = vmul.f32 %v1513, 1.442695
        %v1515 = vpow.pop %v1514
        %v1516 = vadd.f32 %v1515, 1.0
        %v1517 = vrcp.pop %v1516
        %v1518 = vmul.f32 1.0, %v1517
        %v1519 = vmul.f32 %v1512, %v1518
        %v1520 = vld [vmem:[#allocation10] sm:$0xff]
        %v1521 = vld [vmem:[#allocation10 + $0x8] sm:$0xff]
        %v1522 = vld [vmem:[#allocation10 + $0x10] sm:$0xff]
        %v1523 = vld [vmem:[#allocation10 + $0x18] sm:$0xff]
        %v1524 = vld [vmem:[#allocation10 + $0x20] sm:$0xff]
        %v1525 = vld [vmem:[#allocation10 + $0x28] sm:$0xff]
        %v1526 = vld [vmem:[#allocation10 + $0x30] sm:$0xff]
        %v1527 = vld [vmem:[#allocation10 + $0x38] sm:$0xff]
        %v1528 = vld [vmem:[#allocation10 + $0x40] sm:$0xff]
        %v1529 = vld [vmem:[#allocation10 + $0x48] sm:$0xff]
        %v1530 = vld [vmem:[#allocation10 + $0x50] sm:$0xff]
        %v1531 = vld [vmem:[#allocation10 + $0x58] sm:$0xff]
        %v1532 = vld [vmem:[#allocation10 + $0x60] sm:$0xff]
        %v1533 = vld [vmem:[#allocation10 + $0x68] sm:$0xff]
        %v1534 = vld [vmem:[#allocation10 + $0x70] sm:$0xff]
        %v1535 = vld [vmem:[#allocation10 + $0x78] sm:$0xff]
        %v1536 = vld [vmem:[#allocation10 + $0x80] sm:$0xff]
        %v1537 = vld [vmem:[#allocation10 + $0x88] sm:$0xff]
        %v1538 = vld [vmem:[#allocation10 + $0x90] sm:$0xff]
        %v1539 = vld [vmem:[#allocation10 + $0x98] sm:$0xff]
        %v1540 = vld [vmem:[#allocation10 + $0xa0] sm:$0xff]
        %v1541 = vld [vmem:[#allocation10 + $0xa8] sm:$0xff]
        %v1542 = vld [vmem:[#allocation10 + $0xb0] sm:$0xff]
        %v1543 = vld [vmem:[#allocation10 + $0xb8] sm:$0xff]
        %v1544 = vld [vmem:[#allocation10 + $0xc0] sm:$0xff]
        %v1545 = vld [vmem:[#allocation10 + $0xc8] sm:$0xff]
        %v1546 = vld [vmem:[#allocation10 + $0xd0] sm:$0xff]
        %v1547 = vld [vmem:[#allocation10 + $0xd8] sm:$0xff]
        %v1548 = vld [vmem:[#allocation10 + $0xe0] sm:$0xff]
        %v1549 = vld [vmem:[#allocation10 + $0xe8] sm:$0xff]
        %v1550 = vld [vmem:[#allocation10 + $0xf0] sm:$0xff]
        %v1551 = vld [vmem:[#allocation10 + $0xf8] sm:$0xff]
        %v1552 = vld [vmem:[#allocation10 + $0x100] sm:$0xff]
        %v1553 = vld [vmem:[#allocation10 + $0x108] sm:$0xff]
        %v1554 = vld [vmem:[#allocation10 + $0x110] sm:$0xff]
        %v1555 = vld [vmem:[#allocation10 + $0x118] sm:$0xff]
        %v1556 = vld [vmem:[#allocation10 + $0x120] sm:$0xff]
        %v1557 = vld [vmem:[#allocation10 + $0x128] sm:$0xff]
        %v1558 = vld [vmem:[#allocation10 + $0x130] sm:$0xff]
        %v1559 = vld [vmem:[#allocation10 + $0x138] sm:$0xff]
        %v1560 = vld [vmem:[#allocation10 + $0x140] sm:$0xff]
        %v1561 = vld [vmem:[#allocation10 + $0x148] sm:$0xff]
        %v1562 = vld [vmem:[#allocation10 + $0x150] sm:$0xff]
        %v1563 = vld [vmem:[#allocation10 + $0x158] sm:$0xff]
        %v1564 = vld [vmem:[#allocation10 + $0x160] sm:$0xff]
        %v1565 = vld [vmem:[#allocation10 + $0x168] sm:$0xff]
        %v1566 = vld [vmem:[#allocation10 + $0x170] sm:$0xff]
        %v1567 = vld [vmem:[#allocation10 + $0x178] sm:$0xff]
        %v1568 = vld [vmem:[#allocation10 + $0x180] sm:$0xff]
        %v1569 = vld [vmem:[#allocation10 + $0x188] sm:$0xff]
        %v1570 = vld [vmem:[#allocation10 + $0x190] sm:$0xff]
        %v1571 = vld [vmem:[#allocation10 + $0x198] sm:$0xff]
        %v1572 = vld [vmem:[#allocation10 + $0x1a0] sm:$0xff]
        %v1573 = vld [vmem:[#allocation10 + $0x1a8] sm:$0xff]
        %v1574 = vld [vmem:[#allocation10 + $0x1b0] sm:$0xff]
        %v1575 = vld [vmem:[#allocation10 + $0x1b8] sm:$0xff]
        %v1576 = vld [vmem:[#allocation10 + $0x1c0] sm:$0xff]
        %v1577 = vld [vmem:[#allocation10 + $0x1c8] sm:$0xff]
        %v1578 = vld [vmem:[#allocation10 + $0x1d0] sm:$0xff]
        %v1579 = vld [vmem:[#allocation10 + $0x1d8] sm:$0xff]
        %v1580 = vld [vmem:[#allocation10 + $0x1e0] sm:$0xff]
        %v1581 = vld [vmem:[#allocation10 + $0x1e8] sm:$0xff]
        %v1582 = vld [vmem:[#allocation10 + $0x1f0] sm:$0xff]
        %v1583 = vld [vmem:[#allocation10 + $0x1f8] sm:$0xff]
        %s1584 = scalar_lea.vmem %s6, 2
        %v1585 = vld [vmem:[%s1584] ss:$4 sm:$0xf]
        %v1587 = vlaneseq
        %v1588 = vshrl.u32 %v1587, 7
        %v1589 = vsub.s32 0, %v1588
        %v1590 = vrot.slane %v1585, %v1589
        %v1591 = vlaneseq
        %v1592 = vshrl.u32 %v1591, 7
        %v1593 = vsub.s32 1, %v1592
        %v1594 = vrot.slane %v1585, %v1593
        %v1595 = vlaneseq
        %v1596 = vshrl.u32 %v1595, 7
        %v1597 = vsub.s32 2, %v1596
        %v1598 = vrot.slane %v1585, %v1597
        %v1599 = vlaneseq
        %v1600 = vshrl.u32 %v1599, 7
        %v1601 = vsub.s32 3, %v1600
        %v1602 = vrot.slane %v1585, %v1601
        %1607 = vmatprep.subr.mxu0 %v1521
        %1608 = vmatpush1.msra.mxu0 %v1520
        %1609 = vmatprep.subr.mxu0 %v1525
        %1610 = vmatpush1.msra.mxu0 %v1524
        %1611 = vmatprep.subr.mxu0 %v1529
        %1612 = vmatpush1.msra.mxu0 %v1528
        %1613 = vmatprep.subr.mxu0 %v1533
        %1614 = vmatpush1.msra.mxu0 %v1532
        %1615 = vmatprep.subr.mxu0 %v1537
        %1616 = vmatpush1.msra.mxu0 %v1536
        %1617 = vmatprep.subr.mxu0 %v1541
        %1618 = vmatpush1.msra.mxu0 %v1540
        %1619 = vmatprep.subr.mxu0 %v1545
        %1620 = vmatpush1.msra.mxu0 %v1544
        %1621 = vmatprep.subr.mxu0 %v1549
        %1622 = vmatpush1.msra.mxu0 %v1548
        %1623 = vmatprep.subr.mxu0 %v1553
        %1624 = vmatpush1.msra.mxu0 %v1552
        %1625 = vmatprep.subr.mxu0 %v1557
        %1626 = vmatpush1.msra.mxu0 %v1556
        %1627 = vmatprep.subr.mxu0 %v1561
        %1628 = vmatpush1.msra.mxu0 %v1560
        %1629 = vmatprep.subr.mxu0 %v1565
        %1630 = vmatpush1.msra.mxu0 %v1564
        %1631 = vmatprep.subr.mxu0 %v1569
        %1632 = vmatpush1.msra.mxu0 %v1568
        %1633 = vmatprep.subr.mxu0 %v1573
        %1634 = vmatpush1.msra.mxu0 %v1572
        %1635 = vmatprep.subr.mxu0 %v1577
        %1636 = vmatpush1.msra.mxu0 %v1576
        %1637 = vmatprep.subr.mxu0 %v1581
        %1638 = vmatpush1.msra.mxu0 %v1580
        %1639 = vmatprep.subr.mxu0 0.0
        %1640 = vmatpush1.msra.mxu0 0.0
        %1641 = vmatprep.subr.mxu0 0.0
        %1642 = vmatpush1.msra.mxu0 0.0
        %1643 = vmatprep.subr.mxu0 0.0
        %1644 = vmatpush1.msra.mxu0 0.0
        %1645 = vmatprep.subr.mxu0 0.0
        %1646 = vmatpush1.msra.mxu0 0.0
        %1647 = vmatprep.subr.mxu0 0.0
        %1648 = vmatpush1.msra.mxu0 0.0
        %1649 = vmatprep.subr.mxu0 0.0
        %1650 = vmatpush1.msra.mxu0 0.0
        %1651 = vmatprep.subr.mxu0 0.0
        %1652 = vmatpush1.msra.mxu0 0.0
        %1653 = vmatprep.subr.mxu0 0.0
        %1654 = vmatpush1.msra.mxu0 0.0
        %1655 = vmatprep.subr.mxu0 0.0
        %1656 = vmatpush1.msra.mxu0 0.0
        %1657 = vmatprep.subr.mxu0 0.0
        %1658 = vmatpush1.msra.mxu0 0.0
        %1659 = vmatprep.subr.mxu0 0.0
        %1660 = vmatpush1.msra.mxu0 0.0
        %1661 = vmatprep.subr.mxu0 0.0
        %1662 = vmatpush1.msra.mxu0 0.0
        %1663 = vmatprep.subr.mxu0 0.0
        %1664 = vmatpush1.msra.mxu0 0.0
        %1665 = vmatprep.subr.mxu0 0.0
        %1666 = vmatpush1.msra.mxu0 0.0
        %1667 = vmatprep.subr.mxu0 0.0
        %1668 = vmatpush1.msra.mxu0 0.0
        %1669 = vmatprep.subr.mxu0 0.0
        %1670 = vmatpush1.msra.mxu0 0.0
        %1671 = vmatprep.mubr.f32.mxu0 0.0
        %1672 = vmatmul.mubr.f32.gmra.mrb[0].mxu0 %v1519
        %v1673 = vpop.f32.mrb[0].mxu0
        %v1674 = vadd.f32 %v1590, %v1673
        %v1675 = vpop.f32.mrb[0].mxu0
        %v1676 = vadd.f32 %v1594, %v1675
        %1677 = vdwg.mxu0
        %1678 = vmatprep.subr.mxu0 %v1523
        %1679 = vmatpush1.msra.mxu0 %v1522
        %1680 = vmatprep.subr.mxu0 %v1527
        %1681 = vmatpush1.msra.mxu0 %v1526
        %1682 = vmatprep.subr.mxu0 %v1531
        %1683 = vmatpush1.msra.mxu0 %v1530
        %1684 = vmatprep.subr.mxu0 %v1535
        %1685 = vmatpush1.msra.mxu0 %v1534
        %1686 = vmatprep.subr.mxu0 %v1539
        %1687 = vmatpush1.msra.mxu0 %v1538
        %1688 = vmatprep.subr.mxu0 %v1543
        %1689 = vmatpush1.msra.mxu0 %v1542
        %1690 = vmatprep.subr.mxu0 %v1547
        %1691 = vmatpush1.msra.mxu0 %v1546
        %1692 = vmatprep.subr.mxu0 %v1551
        %1693 = vmatpush1.msra.mxu0 %v1550
        %1694 = vmatprep.subr.mxu0 %v1555
        %1695 = vmatpush1.msra.mxu0 %v1554
        %1696 = vmatprep.subr.mxu0 %v1559
        %1697 = vmatpush1.msra.mxu0 %v1558
        %1698 = vmatprep.subr.mxu0 %v1563
        %1699 = vmatpush1.msra.mxu0 %v1562
        %1700 = vmatprep.subr.mxu0 %v1567
        %1701 = vmatpush1.msra.mxu0 %v1566
        %1702 = vmatprep.subr.mxu0 %v1571
        %1703 = vmatpush1.msra.mxu0 %v1570
        %1704 = vmatprep.subr.mxu0 %v1575
        %1705 = vmatpush1.msra.mxu0 %v1574
        %1706 = vmatprep.subr.mxu0 %v1579
        %1707 = vmatpush1.msra.mxu0 %v1578
        %1708 = vmatprep.subr.mxu0 %v1583
        %1709 = vmatpush1.msra.mxu0 %v1582
        %1710 = vmatprep.subr.mxu0 0.0
        %1711 = vmatpush1.msra.mxu0 0.0
        %1712 = vmatprep.subr.mxu0 0.0
        %1713 = vmatpush1.msra.mxu0 0.0
        %1714 = vmatprep.subr.mxu0 0.0
        %1715 = vmatpush1.msra.mxu0 0.0
        %1716 = vmatprep.subr.mxu0 0.0
        %1717 = vmatpush1.msra.mxu0 0.0
        %1718 = vmatprep.subr.mxu0 0.0
        %1719 = vmatpush1.msra.mxu0 0.0
        %1720 = vmatprep.subr.mxu0 0.0
        %1721 = vmatpush1.msra.mxu0 0.0
        %1722 = vmatprep.subr.mxu0 0.0
        %1723 = vmatpush1.msra.mxu0 0.0
        %1724 = vmatprep.subr.mxu0 0.0
        %1725 = vmatpush1.msra.mxu0 0.0
        %1726 = vmatprep.subr.mxu0 0.0
        %1727 = vmatpush1.msra.mxu0 0.0
        %1728 = vmatprep.subr.mxu0 0.0
        %1729 = vmatpush1.msra.mxu0 0.0
        %1730 = vmatprep.subr.mxu0 0.0
        %1731 = vmatpush1.msra.mxu0 0.0
        %1732 = vmatprep.subr.mxu0 0.0
        %1733 = vmatpush1.msra.mxu0 0.0
        %1734 = vmatprep.subr.mxu0 0.0
        %1735 = vmatpush1.msra.mxu0 0.0
        %1736 = vmatprep.subr.mxu0 0.0
        %1737 = vmatpush1.msra.mxu0 0.0
        %1738 = vmatprep.subr.mxu0 0.0
        %1739 = vmatpush1.msra.mxu0 0.0
        %1740 = vmatprep.subr.mxu0 0.0
        %1741 = vmatpush1.msra.mxu0 0.0
        %1742 = vmatprep.mubr.f32.mxu0 0.0
        %1743 = vmatmul.mubr.f32.gmra.mrb[0].mxu0 %v1519
        %v1744 = vpop.f32.mrb[0].mxu0
        %v1745 = vadd.f32 %v1598, %v1744
        %v1746 = vpop.f32.mrb[0].mxu0
        %v1747 = vadd.f32 %v1602, %v1746
        %1748 = vdwg.mxu0
        %v1749 = vsub.f32 0.0, %v1674
        %v1750 = vsub.f32 0.0, %v1676
        %v1751 = vsub.f32 0.0, %v1745
        %v1752 = vsub.f32 0.0, %v1747
        %v1753 = vmul.f32 %v1749, 1.442695
        %v1754 = vpow.pop %v1753
        %v1755 = vmul.f32 %v1750, 1.442695
        %v1756 = vpow.pop %v1755
        %v1757 = vmul.f32 %v1751, 1.442695
        %v1758 = vpow.pop %v1757
        %v1759 = vmul.f32 %v1752, 1.442695
        %v1760 = vpow.pop %v1759
        %v1761 = vadd.f32 %v1754, 1.0
        %v1762 = vadd.f32 %v1756, 1.0
        %v1763 = vadd.f32 %v1758, 1.0
        %v1764 = vadd.f32 %v1760, 1.0
        %v1765 = vrcp.pop %v1761
        %v1766 = vmul.f32 1.0, %v1765
        %v1767 = vrcp.pop %v1762
        %v1768 = vmul.f32 1.0, %v1767
        %v1769 = vrcp.pop %v1763
        %v1770 = vmul.f32 1.0, %v1769
        %v1771 = vrcp.pop %v1764
        %v1772 = vmul.f32 1.0, %v1771
        %v1773 = vlaneseq
        %v1774 = vshrl.u32 %v1773, 7
        %v1775 = vsub.s32 0, %v1774
        %v1776 = vrot.slane %v1766, %v1775
        %v1777 = vlaneseq
        %v1778 = vshrl.u32 %v1777, 7
        %v1779 = vsub.s32 0, %v1778
        %v1780 = vrot.slane %v1768, %v1779
        %v1781 = vlaneseq
        %v1782 = vshrl.u32 %v1781, 7
        %v1783 = vsub.s32 0, %v1782
        %v1784 = vrot.slane %v1770, %v1783
        %v1785 = vlaneseq
        %v1786 = vshrl.u32 %v1785, 7
        %v1787 = vsub.s32 0, %v1786
        %v1788 = vrot.slane %v1772, %v1787
        %v1789 = vmul.f32 %v1282, %v1776
        %v1790 = vmul.f32 %v1283, %v1780
        %v1791 = vmul.f32 %v1284, %v1784
        %v1792 = vmul.f32 %v1285, %v1788
        %v1793 = vmul.f32 %v1286, %v1776
        %v1794 = vmul.f32 %v1287, %v1780
        %v1795 = vmul.f32 %v1288, %v1784
        %v1796 = vmul.f32 %v1289, %v1788
        %v1797 = vld [vmem:[#allocation11] sm:$0xff]
        %v1798 = vld [vmem:[#allocation11 + $0x8] sm:$0xff]
        %v1799 = vld [vmem:[#allocation11 + $0x10] sm:$0xff]
        %v1800 = vld [vmem:[#allocation11 + $0x18] sm:$0xff]
        %v1801 = vld [vmem:[#allocation11 + $0x20] sm:$0xff]
        %v1802 = vld [vmem:[#allocation11 + $0x28] sm:$0xff]
        %v1803 = vld [vmem:[#allocation11 + $0x30] sm:$0xff]
        %v1804 = vld [vmem:[#allocation11 + $0x38] sm:$0xff]
        %v1805 = vld [vmem:[#allocation11 + $0x40] sm:$0xff]
        %v1806 = vld [vmem:[#allocation11 + $0x48] sm:$0xff]
        %v1807 = vld [vmem:[#allocation11 + $0x50] sm:$0xff]
        %v1808 = vld [vmem:[#allocation11 + $0x58] sm:$0xff]
        %v1809 = vld [vmem:[#allocation11 + $0x60] sm:$0xff]
        %v1810 = vld [vmem:[#allocation11 + $0x68] sm:$0xff]
        %v1811 = vld [vmem:[#allocation11 + $0x70] sm:$0xff]
        %v1812 = vld [vmem:[#allocation11 + $0x78] sm:$0xff]
        %v1813 = vld [vmem:[#allocation11 + $0x80] sm:$0xff]
        %v1814 = vld [vmem:[#allocation11 + $0x88] sm:$0xff]
        %v1815 = vld [vmem:[#allocation11 + $0x90] sm:$0xff]
        %v1816 = vld [vmem:[#allocation11 + $0x98] sm:$0xff]
        %v1817 = vld [vmem:[#allocation11 + $0xa0] sm:$0xff]
        %v1818 = vld [vmem:[#allocation11 + $0xa8] sm:$0xff]
        %v1819 = vld [vmem:[#allocation11 + $0xb0] sm:$0xff]
        %v1820 = vld [vmem:[#allocation11 + $0xb8] sm:$0xff]
        %v1821 = vld [vmem:[#allocation11 + $0xc0] sm:$0xff]
        %v1822 = vld [vmem:[#allocation11 + $0xc8] sm:$0xff]
        %v1823 = vld [vmem:[#allocation11 + $0xd0] sm:$0xff]
        %v1824 = vld [vmem:[#allocation11 + $0xd8] sm:$0xff]
        %v1825 = vld [vmem:[#allocation11 + $0xe0] sm:$0xff]
        %v1826 = vld [vmem:[#allocation11 + $0xe8] sm:$0xff]
        %v1827 = vld [vmem:[#allocation11 + $0xf0] sm:$0xff]
        %v1828 = vld [vmem:[#allocation11 + $0xf8] sm:$0xff]
        %v1829 = vld [vmem:[#allocation11 + $0x100] sm:$0xff]
        %v1830 = vld [vmem:[#allocation11 + $0x108] sm:$0xff]
        %v1831 = vld [vmem:[#allocation11 + $0x110] sm:$0xff]
        %v1832 = vld [vmem:[#allocation11 + $0x118] sm:$0xff]
        %v1833 = vld [vmem:[#allocation11 + $0x120] sm:$0xff]
        %v1834 = vld [vmem:[#allocation11 + $0x128] sm:$0xff]
        %v1835 = vld [vmem:[#allocation11 + $0x130] sm:$0xff]
        %v1836 = vld [vmem:[#allocation11 + $0x138] sm:$0xff]
        %v1837 = vld [vmem:[#allocation11 + $0x140] sm:$0xff]
        %v1838 = vld [vmem:[#allocation11 + $0x148] sm:$0xff]
        %v1839 = vld [vmem:[#allocation11 + $0x150] sm:$0xff]
        %v1840 = vld [vmem:[#allocation11 + $0x158] sm:$0xff]
        %v1841 = vld [vmem:[#allocation11 + $0x160] sm:$0xff]
        %v1842 = vld [vmem:[#allocation11 + $0x168] sm:$0xff]
        %v1843 = vld [vmem:[#allocation11 + $0x170] sm:$0xff]
        %v1844 = vld [vmem:[#allocation11 + $0x178] sm:$0xff]
        %v1845 = vld [vmem:[#allocation11 + $0x180] sm:$0xff]
        %v1846 = vld [vmem:[#allocation11 + $0x188] sm:$0xff]
        %v1847 = vld [vmem:[#allocation11 + $0x190] sm:$0xff]
        %v1848 = vld [vmem:[#allocation11 + $0x198] sm:$0xff]
        %v1849 = vld [vmem:[#allocation11 + $0x1a0] sm:$0xff]
        %v1850 = vld [vmem:[#allocation11 + $0x1a8] sm:$0xff]
        %v1851 = vld [vmem:[#allocation11 + $0x1b0] sm:$0xff]
        %v1852 = vld [vmem:[#allocation11 + $0x1b8] sm:$0xff]
        %v1853 = vld [vmem:[#allocation11 + $0x1c0] sm:$0xff]
        %v1854 = vld [vmem:[#allocation11 + $0x1c8] sm:$0xff]
        %v1855 = vld [vmem:[#allocation11 + $0x1d0] sm:$0xff]
        %v1856 = vld [vmem:[#allocation11 + $0x1d8] sm:$0xff]
        %v1857 = vld [vmem:[#allocation11 + $0x1e0] sm:$0xff]
        %v1858 = vld [vmem:[#allocation11 + $0x1e8] sm:$0xff]
        %v1859 = vld [vmem:[#allocation11 + $0x1f0] sm:$0xff]
        %v1860 = vld [vmem:[#allocation11 + $0x1f8] sm:$0xff]
        %v1861 = vld [vmem:[%s7] sm:$0x1]
        %v1863 = vlaneseq
        %v1864 = vshrl.u32 %v1863, 7
        %v1865 = vsub.s32 0, %v1864
        %v1866 = vrot.slane %v1861, %v1865
        %1868 = vmatprep.subr.mxu0 0.0
        %1869 = vmatpush1.msra.mxu0 %v1797
        %1870 = vmatprep.subr.mxu0 0.0
        %1871 = vmatpush1.msra.mxu0 %v1798
        %1872 = vmatprep.subr.mxu0 0.0
        %1873 = vmatpush1.msra.mxu0 %v1799
        %1874 = vmatprep.subr.mxu0 0.0
        %1875 = vmatpush1.msra.mxu0 %v1800
        %1876 = vmatprep.subr.mxu0 0.0
        %1877 = vmatpush1.msra.mxu0 %v1801
        %1878 = vmatprep.subr.mxu0 0.0
        %1879 = vmatpush1.msra.mxu0 %v1802
        %1880 = vmatprep.subr.mxu0 0.0
        %1881 = vmatpush1.msra.mxu0 %v1803
        %1882 = vmatprep.subr.mxu0 0.0
        %1883 = vmatpush1.msra.mxu0 %v1804
        %1884 = vmatprep.subr.mxu0 0.0
        %1885 = vmatpush1.msra.mxu0 %v1805
        %1886 = vmatprep.subr.mxu0 0.0
        %1887 = vmatpush1.msra.mxu0 %v1806
        %1888 = vmatprep.subr.mxu0 0.0
        %1889 = vmatpush1.msra.mxu0 %v1807
        %1890 = vmatprep.subr.mxu0 0.0
        %1891 = vmatpush1.msra.mxu0 %v1808
        %1892 = vmatprep.subr.mxu0 0.0
        %1893 = vmatpush1.msra.mxu0 %v1809
        %1894 = vmatprep.subr.mxu0 0.0
        %1895 = vmatpush1.msra.mxu0 %v1810
        %1896 = vmatprep.subr.mxu0 0.0
        %1897 = vmatpush1.msra.mxu0 %v1811
        %1898 = vmatprep.subr.mxu0 0.0
        %1899 = vmatpush1.msra.mxu0 %v1812
        %1900 = vmatprep.subr.mxu0 0.0
        %1901 = vmatpush1.msra.mxu0 %v1813
        %1902 = vmatprep.subr.mxu0 0.0
        %1903 = vmatpush1.msra.mxu0 %v1814
        %1904 = vmatprep.subr.mxu0 0.0
        %1905 = vmatpush1.msra.mxu0 %v1815
        %1906 = vmatprep.subr.mxu0 0.0
        %1907 = vmatpush1.msra.mxu0 %v1816
        %1908 = vmatprep.subr.mxu0 0.0
        %1909 = vmatpush1.msra.mxu0 %v1817
        %1910 = vmatprep.subr.mxu0 0.0
        %1911 = vmatpush1.msra.mxu0 %v1818
        %1912 = vmatprep.subr.mxu0 0.0
        %1913 = vmatpush1.msra.mxu0 %v1819
        %1914 = vmatprep.subr.mxu0 0.0
        %1915 = vmatpush1.msra.mxu0 %v1820
        %1916 = vmatprep.subr.mxu0 0.0
        %1917 = vmatpush1.msra.mxu0 %v1821
        %1918 = vmatprep.subr.mxu0 0.0
        %1919 = vmatpush1.msra.mxu0 %v1822
        %1920 = vmatprep.subr.mxu0 0.0
        %1921 = vmatpush1.msra.mxu0 %v1823
        %1922 = vmatprep.subr.mxu0 0.0
        %1923 = vmatpush1.msra.mxu0 %v1824
        %1924 = vmatprep.subr.mxu0 0.0
        %1925 = vmatpush1.msra.mxu0 %v1825
        %1926 = vmatprep.subr.mxu0 0.0
        %1927 = vmatpush1.msra.mxu0 %v1826
        %1928 = vmatprep.subr.mxu0 0.0
        %1929 = vmatpush1.msra.mxu0 %v1827
        %1930 = vmatprep.subr.mxu0 0.0
        %1931 = vmatpush1.msra.mxu0 %v1828
        %1932 = vmatprep.mubr.f32.mxu0 %v1790
        %1933 = vmatmul.mubr.f32.gmra.mrb[0].mxu0 %v1789
        %v1934 = vpop.f32.mrb[0].mxu0
        %v1935 = vadd.f32 %v1866, %v1934
        %v1936 = vpop.f32.mrb[0].mxu0
        %1937 = vmatprep.mubr.f32.mxu0 %v1794
        %1938 = vmatmul.mubr.f32.gmra.mrb[0].mxu0 %v1793
        %v1939 = vpop.f32.mrb[0].mxu0
        %v1940 = vadd.f32 %v1866, %v1939
        %v1941 = vpop.f32.mrb[0].mxu0
        %1942 = vdwg.mxu0
        %1943 = vmatprep.subr.mxu0 0.0
        %1944 = vmatpush1.msra.mxu0 %v1829
        %1945 = vmatprep.subr.mxu0 0.0
        %1946 = vmatpush1.msra.mxu0 %v1830
        %1947 = vmatprep.subr.mxu0 0.0
        %1948 = vmatpush1.msra.mxu0 %v1831
        %1949 = vmatprep.subr.mxu0 0.0
        %1950 = vmatpush1.msra.mxu0 %v1832
        %1951 = vmatprep.subr.mxu0 0.0
        %1952 = vmatpush1.msra.mxu0 %v1833
        %1953 = vmatprep.subr.mxu0 0.0
        %1954 = vmatpush1.msra.mxu0 %v1834
        %1955 = vmatprep.subr.mxu0 0.0
        %1956 = vmatpush1.msra.mxu0 %v1835
        %1957 = vmatprep.subr.mxu0 0.0
        %1958 = vmatpush1.msra.mxu0 %v1836
        %1959 = vmatprep.subr.mxu0 0.0
        %1960 = vmatpush1.msra.mxu0 %v1837
        %1961 = vmatprep.subr.mxu0 0.0
        %1962 = vmatpush1.msra.mxu0 %v1838
        %1963 = vmatprep.subr.mxu0 0.0
        %1964 = vmatpush1.msra.mxu0 %v1839
        %1965 = vmatprep.subr.mxu0 0.0
        %1966 = vmatpush1.msra.mxu0 %v1840
        %1967 = vmatprep.subr.mxu0 0.0
        %1968 = vmatpush1.msra.mxu0 %v1841
        %1969 = vmatprep.subr.mxu0 0.0
        %1970 = vmatpush1.msra.mxu0 %v1842
        %1971 = vmatprep.subr.mxu0 0.0
        %1972 = vmatpush1.msra.mxu0 %v1843
        %1973 = vmatprep.subr.mxu0 0.0
        %1974 = vmatpush1.msra.mxu0 %v1844
        %1975 = vmatprep.subr.mxu0 0.0
        %1976 = vmatpush1.msra.mxu0 %v1845
        %1977 = vmatprep.subr.mxu0 0.0
        %1978 = vmatpush1.msra.mxu0 %v1846
        %1979 = vmatprep.subr.mxu0 0.0
        %1980 = vmatpush1.msra.mxu0 %v1847
        %1981 = vmatprep.subr.mxu0 0.0
        %1982 = vmatpush1.msra.mxu0 %v1848
        %1983 = vmatprep.subr.mxu0 0.0
        %1984 = vmatpush1.msra.mxu0 %v1849
        %1985 = vmatprep.subr.mxu0 0.0
        %1986 = vmatpush1.msra.mxu0 %v1850
        %1987 = vmatprep.subr.mxu0 0.0
        %1988 = vmatpush1.msra.mxu0 %v1851
        %1989 = vmatprep.subr.mxu0 0.0
        %1990 = vmatpush1.msra.mxu0 %v1852
        %1991 = vmatprep.subr.mxu0 0.0
        %1992 = vmatpush1.msra.mxu0 %v1853
        %1993 = vmatprep.subr.mxu0 0.0
        %1994 = vmatpush1.msra.mxu0 %v1854
        %1995 = vmatprep.subr.mxu0 0.0
        %1996 = vmatpush1.msra.mxu0 %v1855
        %1997 = vmatprep.subr.mxu0 0.0
        %1998 = vmatpush1.msra.mxu0 %v1856
        %1999 = vmatprep.subr.mxu0 0.0
        %2000 = vmatpush1.msra.mxu0 %v1857
        %2001 = vmatprep.subr.mxu0 0.0
        %2002 = vmatpush1.msra.mxu0 %v1858
        %2003 = vmatprep.subr.mxu0 0.0
        %2004 = vmatpush1.msra.mxu0 %v1859
        %2005 = vmatprep.subr.mxu0 0.0
        %2006 = vmatpush1.msra.mxu0 %v1860
        %2007 = vmatprep.mubr.f32.mxu0 %v1792
        %2008 = vmatmul.mubr.f32.gmra.mrb[0].mxu0 %v1791
        %v2009 = vpop.f32.mrb[0].mxu0
        %v2010 = vadd.f32 %v1935, %v2009
        %v2011 = vpop.f32.mrb[0].mxu0
        %2012 = vmatprep.mubr.f32.mxu0 %v1796
        %2013 = vmatmul.mubr.f32.gmra.mrb[0].mxu0 %v1795
        %v2014 = vpop.f32.mrb[0].mxu0
        %v2015 = vadd.f32 %v1940, %v2014
        %v2016 = vpop.f32.mrb[0].mxu0
        %2017 = vdwg.mxu0
        %v2018 = vadd.f32 %v2010, %v424
        %v2019 = vadd.f32 %v2015, %v425
        %2020 = vst [vmem:[%s423] sm:$0xff] %v2018
        %2021 = vst [vmem:[%s423 + $0x8] sm:$0xff] %v2019
        %s2022 = sand.u32 %s231, 1
        %s2023 = scalar_lea.sflag [#allocation4], %s2022
        %s2024 = sand.u32 %s231, 1
        %s2025 = smul.addr %s2024, 16
        %s2026 = scalar_lea.vmem [#allocation13], %s2025
        // Predicated region
        $region81: #{tpu_custom_call.1} parent=55 // pred_check
          %p2027 = pneg %p241
        $region82: #{tpu_custom_call.1} parent=55 // pred_check_branch
          %2029 = sbr.rel (%p2027) target = $region84
        $region83: #{tpu_custom_call.1} parent=55 // pred_region
          %s2031 = ssub.s32 256, 256
          %2032 = vsyncadd %s2023, %s2031
          %s2033 = smul.addr %s29, 2
          %s2034 = smul.addr %s2033, 128
          %s2035 = scalar_lea.hbm %s9, %s2034
          %s2036 = sshll.u32 %s2026, 4
          %s2037 = int_to_ptr.vmem [resolvable:$true] %s2036
          %2042 = dma.vmem_to_hbm [thread:$0]  %s2037, 256, %s2035, %s2023, 128, 128, 8
        $region84: #{tpu_custom_call.1} parent=55 // pred_fallthru
          _
      $region56: #{tpu_custom_call.1} parent=5 // pred_fallthru
        _
      %p2043 = scmp.le.s32.totalorder 2, %s24
      // Predicated region
      $region85: #{tpu_custom_call.1} parent=5 // pred_check
        %p2044 = pneg %p2043
      $region86: #{tpu_custom_call.1} parent=5 // pred_check_branch
        %2046 = sbr.rel (%p2044) target = $region88
      $region87: #{tpu_custom_call.1} parent=5 // pred_region
        %s2047 = ssub.s32 %s24, 2
        // Predicated region
        $region89: #{tpu_custom_call.1} parent=87 // pred_check
          %p2048 = pneg %p247
        $region90: #{tpu_custom_call.1} parent=87 // pred_check_branch
          %2050 = sbr.rel (%p2048) target = $region92
        $region91: #{tpu_custom_call.1} parent=87 // pred_region
          %s2051 = sand.u32 %s232, 1
          %s2052 = scalar_lea.sflag [#allocation4], %s2051
          %s2053 = sand.u32 %s232, 1
          %s2054 = smul.addr %s2053, 16
          %s2055 = scalar_lea.vmem [#allocation13], %s2054
          %2056 = dma.done %s2052, 256
        $region92: #{tpu_custom_call.1} parent=87 // pred_fallthru
          _
      $region88: #{tpu_custom_call.1} parent=5 // pred_fallthru
        _
    $region6: #{tpu_custom_call.1} parent=1 // loop_footer
      %s28 = sadd.s32 1, %s24
    $region7: #{tpu_custom_call.1} parent=1 // loop_footer_branch
      %23 = sbr.rel target = $region3
    $region8: #{tpu_custom_call.1} parent=1 // loop_exit
      _
    %2057 = vsyncpa [#allocation3], 1
    %s2058 = scalar_lea.sflag [#allocation3], 1
    %2059 = vsyncpa %s2058, 1
    %2060 = vsyncpa [#allocation6], 1
    %2061 = vsyncpa [#allocation9], 1
    %2062 = vsyncpa [#allocation12], 1
    %2063 = vsyncpa [#allocation4], 1
    %s2064 = scalar_lea.sflag [#allocation4], 1
    %2065 = vsyncpa %s2064, 1

</llo_original>
